<compile_context>
chip_gen: v5e
topology: v5e:2x2
jax: 0.10.0
libtpu: 0.0.40
codegen_flags: <defaults>
</compile_context>

<pallas_src>
import functools

import jax
import jax.numpy as jnp
import numpy as np
from jax.experimental import pallas as pl
from jax.experimental.pallas import tpu as pltpu


# -------------------- Pallas kernels --------------------

def _conv_relu_kernel(w_ref, b_ref, p_ref, o_ref):
    # (OC, K) @ (K, N_tile) -> ReLU, f32 accumulate, bf16 store.
    acc = jnp.dot(w_ref[...], p_ref[...], preferred_element_type=jnp.float32)
    o_ref[...] = jnp.maximum(acc + b_ref[...], 0.0).astype(o_ref.dtype)


def _conv3_linear_softmax_kernel(w_ref, b_ref, p_ref, wl_ref, seg_ref, bl_ref,
                                 o_ref):
    # conv3: (16, K) @ (K, B*49) -> ReLU (f32).
    h = jnp.dot(w_ref[...], p_ref[...], preferred_element_type=jnp.float32)
    h = jnp.maximum(h + b_ref[...], 0.0)                        # (16, B*49)

    # Fused Linear(784 -> A): contract channels per position (VPU), then sum
    # the positions belonging to each batch element via a tiny matmul with the
    # constant segment matrix `seg` (B*49, B).
    n_act = wl_ref.shape[0]
    rows = []
    for a in range(n_act):                                      # A = 8, static
        rows.append(jnp.sum(wl_ref[a] * h, axis=0, keepdims=True))   # (1, B*49)
    s = jnp.concatenate(rows, axis=0)                           # (A, B*49)
    logits = jnp.dot(s, seg_ref[...],
                     preferred_element_type=jnp.float32) + bl_ref[...]  # (A, B)

    y = jnp.abs(logits)                                         # .abs()
    m = jnp.max(y, axis=0, keepdims=True)                       # softmax(actions)
    e = jnp.exp(y - m)
    o_ref[...] = e / jnp.sum(e, axis=0, keepdims=True)          # (A, B)


# -------------------- pallas_call wrappers --------------------

def conv_relu_T(w2d, bcol, patches, *, block_n=None, parallel=False):
    """relu(w2d @ patches + bcol) -> (OC, N) bfloat16.

    w2d: (OC, K) bf16, bcol: (OC, 1) f32, patches: (K, N) bf16.
    Tiled along N (the lane axis); block_n=None -> one full-array tile.
    """
    OC, K = w2d.shape
    K2, N = patches.shape
    assert K == K2
    bn = N if block_n is None else block_n
    grid = (pl.cdiv(N, bn),)
    return pl.pallas_call(
        _conv_relu_kernel,
        out_shape=jax.ShapeDtypeStruct((OC, N), jnp.bfloat16),
        grid=grid,
        in_specs=[
            pl.BlockSpec((OC, K), lambda i: (0, 0)),
            pl.BlockSpec((OC, 1), lambda i: (0, 0)),
            pl.BlockSpec((K, bn), lambda i: (0, i)),
        ],
        out_specs=pl.BlockSpec((OC, bn), lambda i: (0, i)),
        compiler_params=pltpu.CompilerParams(
            dimension_semantics=("parallel",) if parallel else ("arbitrary",)),
    )(w2d, bcol, patches)


def conv3_linear_softmax(w2d, bcol, patches, wl_big, seg, blc):
    """conv3 + ReLU + Linear + abs + softmax fused; returns (actions, B)."""
    OC, K = w2d.shape
    _, N = patches.shape
    A = wl_big.shape[0]
    Bn = seg.shape[1]
    return pl.pallas_call(
        _conv3_linear_softmax_kernel,
        out_shape=jax.ShapeDtypeStruct((A, Bn), jnp.float32),
        grid=(1,),
        in_specs=[
            pl.BlockSpec((OC, K), lambda i: (0, 0)),
            pl.BlockSpec((OC, 1), lambda i: (0, 0)),
            pl.BlockSpec((K, N), lambda i: (0, 0)),
            pl.BlockSpec((A, OC, N), lambda i: (0, 0, 0)),
            pl.BlockSpec((N, Bn), lambda i: (0, 0)),
            pl.BlockSpec((A, 1), lambda i: (0, 0)),
        ],
        out_specs=pl.BlockSpec((A, Bn), lambda i: (0, 0)),
        compiler_params=pltpu.CompilerParams(
            dimension_semantics=("arbitrary",)),
    )(w2d, bcol, patches, wl_big, seg, blc)


# -------------------- im2col glue (transposed layout) --------------------

def _im2col_T(x, k, s, out_dtype):
    """x: (C, B, H, W) -> patches (C*k*k, B*OH*OW).

    Row order (c, kh, kw) matches PyTorch weight.reshape(out_c, -1);
    column order is (b, oh, ow)."""
    C, B, H, W = x.shape
    OH = (H - k) // s + 1
    OW = (W - k) // s + 1
    taps = []
    for kh in range(k):
        for kw in range(k):
            taps.append(x[:, :, kh:kh + s * (OH - 1) + 1:s,
                          kw:kw + s * (OW - 1) + 1:s])
    p = jnp.stack(taps, axis=1)                    # (C, k*k, B, OH, OW)
    return p.reshape(C * k * k, B * OH * OW).astype(out_dtype), OH, OW


# -------------------- the module forward --------------------

def action_conv_attention_encoder(x, params, difference=False):
    if difference:
        x = (x[:, 0] - x[:, 1])[:, None]            # (B, 1, H, W)
    x = jax.lax.stop_gradient(x)                    # x.detach()
    B = x.shape[0]
    xt = jnp.transpose(x, (1, 0, 2, 3))             # (C_in, B, H, W)

    p1, oh1, ow1 = _im2col_T(xt, 3, 2, jnp.bfloat16)
    h1 = conv_relu_T(params["w1_2d"], params["b1c"], p1,
                     block_n=1024, parallel=True)   # (32, B*31*31)
    h1 = h1.reshape(h1.shape[0], B, oh1, ow1)

    p2, oh2, ow2 = _im2col_T(h1, 3, 2, jnp.bfloat16)
    h2 = conv_relu_T(params["w2_2d"], params["b2c"], p2)   # (16, B*15*15)
    h2 = h2.reshape(h2.shape[0], B, oh2, ow2)

    p3, _, _ = _im2col_T(h2, 3, 2, jnp.bfloat16)    # (144, B*49)
    probs_t = conv3_linear_softmax(params["w3_2d"], params["b3c"], p3,
                                   params["wl_big"], params["seg"],
                                   params["blc"])   # (actions, B)
    return probs_t.T                                # (B, actions)


# -------------------- one-time parameter preprocessing --------------------

def prepare_params(raw, batch):
    """Weight reshapes / casts done once, outside the jitted forward."""
    a = raw["wl"].shape[0]
    oc3 = raw["w3"].shape[0]
    p = raw["wl"].shape[1] // oc3                   # 784 // 16 = 49 positions
    seg = (jnp.arange(batch * p)[:, None] // p
           == jnp.arange(batch)[None, :]).astype(jnp.float32)   # (B*49, B)
    return {
        "w1_2d": raw["w1"].reshape(raw["w1"].shape[0], -1).astype(jnp.bfloat16),
        "b1c": raw["b1"].reshape(-1, 1).astype(jnp.float32),
        "w2_2d": raw["w2"].reshape(raw["w2"].shape[0], -1).astype(jnp.bfloat16),
        "b2c": raw["b2"].reshape(-1, 1).astype(jnp.float32),
        "w3_2d": raw["w3"].reshape(raw["w3"].shape[0], -1).astype(jnp.bfloat16),
        "b3c": raw["b3"].reshape(-1, 1).astype(jnp.float32),
        # Linear weight[a, c*49 + pos] -> (A, 16, 49), tiled over batch so that
        # wl_big[a, c, b*49 + pos] == weight[a, c*49 + pos] (NCHW flatten order).
        "wl_big": jnp.tile(raw["wl"].reshape(a, oc3, p),
                           (1, 1, batch)).astype(jnp.float32),
        "seg": seg,
        "blc": raw["bl"].reshape(a, 1).astype(jnp.float32),
    }


# -------------------- pure-XLA reference (for self-check) --------------------

def reference_forward(x, raw, difference=False):
    if difference:
        x = (x[:, 0] - x[:, 1])[:, None]
    h = x
    for w, b in (("w1", "b1"), ("w2", "b2"), ("w3", "b3")):
        h = jax.lax.conv_general_dilated(
            h, raw[w], window_strides=(2, 2), padding="VALID",
            dimension_numbers=("NCHW", "OIHW", "NCHW"))
        h = jnp.maximum(h + raw[b][None, :, None, None], 0.0)
    flat = h.reshape(h.shape[0], -1)                # NCHW flatten == View(-1)
    y = jnp.abs(flat @ raw["wl"].T + raw["bl"][None, :])
    return jax.nn.softmax(y, axis=-1)


# -------------------- deterministic parameter init --------------------

def orthogonal_init(key, shape):
    """Mimics nn.init.orthogonal_ on the flattened (out_c, fan_in) matrix."""
    out_c = shape[0]
    fan_in = int(np.prod(shape[1:]))
    rows, cols = out_c, fan_in
    n, m = max(rows, cols), min(rows, cols)
    a = jax.random.normal(key, (n, m), dtype=jnp.float32)
    q, r = jnp.linalg.qr(a)
    q = q * jnp.sign(jnp.diagonal(r))
    if rows < cols:
        q = q.T
    return q[:rows, :cols].reshape(shape).astype(jnp.float32)


if __name__ == "__main__":
    in_latents = 4
    in_nc = 3
    difference = False                      # module default
    actions = in_latents * 2
    frame_multi = 1 if difference else 2

    key = jax.random.PRNGKey(0)
    k1, k2, k3, kx, kw = jax.random.split(key, 5)
    raw = {
        "w1": orthogonal_init(k1, (32, in_nc * frame_multi, 3, 3)),
        "b1": jnp.zeros((32,), jnp.float32),
        "w2": orthogonal_init(k2, (16, 32, 3, 3)),
        "b2": jnp.zeros((16,), jnp.float32),
        "w3": orthogonal_init(k3, (16, 16, 3, 3)),
        "b3": jnp.zeros((16,), jnp.float32),
        # zero_init=True: linear weight zeros, bias ones
        "wl": jnp.zeros((actions, 784), jnp.float32),
        "bl": jnp.ones((actions,), jnp.float32),
    }

    # Input: NCHW, two frames stacked on channels (difference=False).
    # 64x64 spatial is implied by Linear(784, .): 64 -> 31 -> 15 -> 7, 16*7*7.
    x = jax.random.normal(kx, (2, in_nc * frame_multi, 64, 64), jnp.float32)

    fwd = jax.jit(functools.partial(action_conv_attention_encoder,
                                    difference=difference))

    # --- run with the module's default init (zero weight, ones bias) ---
    params = prepare_params(raw, batch=x.shape[0])
    out = jax.block_until_ready(fwd(x, params))
    assert out.shape == (2, actions)
    np.testing.assert_allclose(np.asarray(out.sum(-1)), np.ones(2), rtol=1e-5)
    np.testing.assert_allclose(np.asarray(out),
                               np.full((2, actions), 1.0 / actions), atol=1e-6)

    # --- self-check against a pure-XLA reference with a non-trivial head ---
    raw2 = dict(raw)
    raw2["wl"] = 0.05 * jax.random.normal(kw, (actions, 784), jnp.float32)
    params2 = prepare_params(raw2, batch=x.shape[0])
    out2 = jax.block_until_ready(fwd(x, params2))
    ref2 = np.asarray(reference_forward(x, raw2, difference))
    np.testing.assert_allclose(np.asarray(out2), ref2, atol=3e-2)

    print("KERNEL_OK")
</pallas_src>

<mosaic_0001>
module attributes {stable_mosaic.version = 11 : i64} {
  func.func @_conv_relu_kernel(%arg0: i32, %arg1: memref<32x54xbf16, #tpu.memory_space<vmem>>, %arg2: memref<32x1xf32, #tpu.memory_space<vmem>>, %arg3: memref<54x1024xbf16, #tpu.memory_space<vmem>>, %arg4: memref<32x1024xbf16, #tpu.memory_space<vmem>>) attributes {dimension_semantics = [#tpu.dimension_semantics<parallel>], iteration_bounds = array<i64: 2>, scalar_prefetch = 0 : i64, scratch_operands = 0 : i64, tpu.core_type = #tpu.core_type<tc>, window_params = [{pipeline_mode = #tpu.pipeline_mode<synchronous>, transform_indices = @transform_0, window_bounds = array<i64: 32, 54>}, {pipeline_mode = #tpu.pipeline_mode<synchronous>, transform_indices = @transform_1, window_bounds = array<i64: 32, 1>}, {transform_indices = @transform_2, window_bounds = array<i64: 54, 1024>}, {transform_indices = @transform_3, window_bounds = array<i64: 32, 1024>}]} {
    %c0 = arith.constant 0 : index
    %c0_0 = arith.constant 0 : index
    %0 = vector.load %arg1[%c0, %c0_0] : memref<32x54xbf16, #tpu.memory_space<vmem>>, vector<32x54xbf16>
    %c0_1 = arith.constant 0 : index
    %c0_2 = arith.constant 0 : index
    %1 = vector.load %arg3[%c0_1, %c0_2] : memref<54x1024xbf16, #tpu.memory_space<vmem>>, vector<54x1024xbf16>
    %cst = arith.constant dense<0.000000e+00> : vector<32x1024xf32>
    %2 = tpu.matmul %0, %1, %cst {dimension_numbers = #tpu.dot_dimension_numbers<[1], [0], [0], [1], [0, 0, 1, 1], [], []>} : vector<32x54xbf16>, vector<54x1024xbf16>, vector<32x1024xf32> -> vector<32x1024xf32>
    %c0_3 = arith.constant 0 : index
    %c0_4 = arith.constant 0 : index
    %3 = vector.load %arg2[%c0_3, %c0_4] : memref<32x1xf32, #tpu.memory_space<vmem>>, vector<32x1xf32>
    %4 = vector.broadcast %3 : vector<32x1xf32> to vector<32x1024xf32>
    %5 = arith.addf %2, %4 : vector<32x1024xf32>
    %cst_5 = arith.constant 0.000000e+00 : f32
    %6 = vector.broadcast %cst_5 : f32 to vector<32x1024xf32>
    %7 = arith.maximumf %5, %6 : vector<32x1024xf32>
    %8 = arith.truncf %7 : vector<32x1024xf32> to vector<32x1024xbf16>
    %c0_6 = arith.constant 0 : index
    %c0_7 = arith.constant 0 : index
    %9 = vector.load %arg4[%c0_6, %c0_7] : memref<32x1024xbf16, #tpu.memory_space<vmem>>, vector<32x1024xbf16>
    tpu.vector_store %arg4[%c0_6, %c0_7], %8 {strides = array<i32>} : memref<32x1024xbf16, #tpu.memory_space<vmem>>, vector<32x1024xbf16>,
    return
  }
  func.func @transform_0(%arg0: i32) -> (i32, i32) {
    %c0_i32 = arith.constant 0 : i32
    %c0_i32_0 = arith.constant 0 : i32
    %c0_i32_1 = arith.constant 0 : i32
    return %c0_i32, %c0_i32_0 : i32, i32
  }
  func.func @transform_1(%arg0: i32) -> (i32, i32) {
    %c0_i32 = arith.constant 0 : i32
    %c0_i32_0 = arith.constant 0 : i32
    %c0_i32_1 = arith.constant 0 : i32
    return %c0_i32, %c0_i32_0 : i32, i32
  }
  func.func @transform_2(%arg0: i32) -> (i32, i32) {
    %c0_i32 = arith.constant 0 : i32
    %c0_i32_0 = arith.constant 0 : i32
    return %c0_i32, %arg0 : i32, i32
  }
  func.func @transform_3(%arg0: i32) -> (i32, i32) {
    %c0_i32 = arith.constant 0 : i32
    %c0_i32_0 = arith.constant 0 : i32
    return %c0_i32, %arg0 : i32, i32
  }
}

module attributes {stable_mosaic.version = 11 : i64} {
  func.func @_conv_relu_kernel(%arg0: i32, %arg1: memref<16x288xbf16, #tpu.memory_space<vmem>>, %arg2: memref<16x1xf32, #tpu.memory_space<vmem>>, %arg3: memref<288x450xbf16, #tpu.memory_space<vmem>>, %arg4: memref<16x450xbf16, #tpu.memory_space<vmem>>) attributes {dimension_semantics = [#tpu.dimension_semantics<arbitrary>], iteration_bounds = array<i64: 1>, scalar_prefetch = 0 : i64, scratch_operands = 0 : i64, tpu.core_type = #tpu.core_type<tc>, window_params = [{pipeline_mode = #tpu.pipeline_mode<synchronous>, transform_indices = @transform_0, window_bounds = array<i64: 16, 288>}, {pipeline_mode = #tpu.pipeline_mode<synchronous>, transform_indices = @transform_1, window_bounds = array<i64: 16, 1>}, {transform_indices = @transform_2, window_bounds = array<i64: 288, 450>}, {transform_indices = @transform_3, window_bounds = array<i64: 16, 450>}]} {
    %c0 = arith.constant 0 : index
    %c0_0 = arith.constant 0 : index
    %0 = vector.load %arg1[%c0, %c0_0] : memref<16x288xbf16, #tpu.memory_space<vmem>>, vector<16x288xbf16>
    %c0_1 = arith.constant 0 : index
    %c0_2 = arith.constant 0 : index
    %1 = vector.load %arg3[%c0_1, %c0_2] : memref<288x450xbf16, #tpu.memory_space<vmem>>, vector<288x450xbf16>
    %cst = arith.constant dense<0.000000e+00> : vector<16x450xf32>
    %2 = tpu.matmul %0, %1, %cst {dimension_numbers = #tpu.dot_dimension_numbers<[1], [0], [0], [1], [0, 0, 1, 1], [], []>} : vector<16x288xbf16>, vector<288x450xbf16>, vector<16x450xf32> -> vector<16x450xf32>
    %c0_3 = arith.constant 0 : index
    %c0_4 = arith.constant 0 : index
    %3 = vector.load %arg2[%c0_3, %c0_4] : memref<16x1xf32, #tpu.memory_space<vmem>>, vector<16x1xf32>
    %4 = vector.broadcast %3 : vector<16x1xf32> to vector<16x450xf32>
    %5 = arith.addf %2, %4 : vector<16x450xf32>
    %cst_5 = arith.constant 0.000000e+00 : f32
    %6 = vector.broadcast %cst_5 : f32 to vector<16x450xf32>
    %7 = arith.maximumf %5, %6 : vector<16x450xf32>
    %8 = arith.truncf %7 : vector<16x450xf32> to vector<16x450xbf16>
    %c0_6 = arith.constant 0 : index
    %c0_7 = arith.constant 0 : index
    %9 = vector.load %arg4[%c0_6, %c0_7] : memref<16x450xbf16, #tpu.memory_space<vmem>>, vector<16x450xbf16>
    tpu.vector_store %arg4[%c0_6, %c0_7], %8 {strides = array<i32>} : memref<16x450xbf16, #tpu.memory_space<vmem>>, vector<16x450xbf16>,
    return
  }
  func.func @transform_0(%arg0: i32) -> (i32, i32) {
    %c0_i32 = arith.constant 0 : i32
    %c0_i32_0 = arith.constant 0 : i32
    %c0_i32_1 = arith.constant 0 : i32
    return %c0_i32, %c0_i32_0 : i32, i32
  }
  func.func @transform_1(%arg0: i32) -> (i32, i32) {
    %c0_i32 = arith.constant 0 : i32
    %c0_i32_0 = arith.constant 0 : i32
    %c0_i32_1 = arith.constant 0 : i32
    return %c0_i32, %c0_i32_0 : i32, i32
  }
  func.func @transform_2(%arg0: i32) -> (i32, i32) {
    %c0_i32 = arith.constant 0 : i32
    %c0_i32_0 = arith.constant 0 : i32
    return %c0_i32, %arg0 : i32, i32
  }
  func.func @transform_3(%arg0: i32) -> (i32, i32) {
    %c0_i32 = arith.constant 0 : i32
    %c0_i32_0 = arith.constant 0 : i32
    return %c0_i32, %arg0 : i32, i32
  }
}

module attributes {stable_mosaic.version = 11 : i64} {
  func.func @_conv3_linear_softmax_kernel(%arg0: i32, %arg1: memref<16x144xbf16, #tpu.memory_space<vmem>>, %arg2: memref<16x1xf32, #tpu.memory_space<vmem>>, %arg3: memref<144x98xbf16, #tpu.memory_space<vmem>>, %arg4: memref<8x16x98xf32, #tpu.memory_space<vmem>>, %arg5: memref<98x2xf32, #tpu.memory_space<vmem>>, %arg6: memref<8x1xf32, #tpu.memory_space<vmem>>, %arg7: memref<8x2xf32, #tpu.memory_space<vmem>>) attributes {dimension_semantics = [#tpu.dimension_semantics<arbitrary>], iteration_bounds = array<i64: 1>, scalar_prefetch = 0 : i64, scratch_operands = 0 : i64, tpu.core_type = #tpu.core_type<tc>, window_params = [{pipeline_mode = #tpu.pipeline_mode<synchronous>, transform_indices = @transform_0, window_bounds = array<i64: 16, 144>}, {pipeline_mode = #tpu.pipeline_mode<synchronous>, transform_indices = @transform_1, window_bounds = array<i64: 16, 1>}, {pipeline_mode = #tpu.pipeline_mode<synchronous>, transform_indices = @transform_2, window_bounds = array<i64: 144, 98>}, {pipeline_mode = #tpu.pipeline_mode<synchronous>, transform_indices = @transform_3, window_bounds = array<i64: 8, 16, 98>}, {pipeline_mode = #tpu.pipeline_mode<synchronous>, transform_indices = @transform_4, window_bounds = array<i64: 98, 2>}, {pipeline_mode = #tpu.pipeline_mode<synchronous>, transform_indices = @transform_5, window_bounds = array<i64: 8, 1>}, {pipeline_mode = #tpu.pipeline_mode<synchronous>, transform_indices = @transform_6, window_bounds = array<i64: 8, 2>}]} {
    %c0 = arith.constant 0 : index
    %c0_0 = arith.constant 0 : index
    %0 = vector.load %arg1[%c0, %c0_0] : memref<16x144xbf16, #tpu.memory_space<vmem>>, vector<16x144xbf16>
    %c0_1 = arith.constant 0 : index
    %c0_2 = arith.constant 0 : index
    %1 = vector.load %arg3[%c0_1, %c0_2] : memref<144x98xbf16, #tpu.memory_space<vmem>>, vector<144x98xbf16>
    %cst = arith.constant dense<0.000000e+00> : vector<16x98xf32>
    %2 = tpu.matmul %0, %1, %cst {dimension_numbers = #tpu.dot_dimension_numbers<[1], [0], [0], [1], [0, 0, 1, 1], [], []>} : vector<16x144xbf16>, vector<144x98xbf16>, vector<16x98xf32> -> vector<16x98xf32>
    %c0_3 = arith.constant 0 : index
    %c0_4 = arith.constant 0 : index
    %3 = vector.load %arg2[%c0_3, %c0_4] : memref<16x1xf32, #tpu.memory_space<vmem>>, vector<16x1xf32>
    %4 = vector.broadcast %3 : vector<16x1xf32> to vector<16x98xf32>
    %5 = arith.addf %2, %4 : vector<16x98xf32>
    %cst_5 = arith.constant 0.000000e+00 : f32
    %6 = vector.broadcast %cst_5 : f32 to vector<16x98xf32>
    %7 = arith.maximumf %5, %6 : vector<16x98xf32>
    %c0_6 = arith.constant 0 : index
    %c0_7 = arith.constant 0 : index
    %c0_8 = arith.constant 0 : index
    %8 = vector.load %arg4[%c0_6, %c0_7, %c0_8] : memref<8x16x98xf32, #tpu.memory_space<vmem>>, vector<1x16x98xf32>
    %9 = vector.shape_cast %8 : vector<1x16x98xf32> to vector<16x98xf32>
    %10 = arith.mulf %9, %7 : vector<16x98xf32>
    %cst_9 = arith.constant dense<0.000000e+00> : vector<98xf32>
    %11 = vector.multi_reduction <add>, %10, %cst_9 [0] : vector<16x98xf32> to vector<98xf32>
    %12 = vector.shape_cast %11 : vector<98xf32> to vector<1x98xf32>
    %c1 = arith.constant 1 : index
    %c0_10 = arith.constant 0 : index
    %c0_11 = arith.constant 0 : index
    %13 = vector.load %arg4[%c1, %c0_10, %c0_11] : memref<8x16x98xf32, #tpu.memory_space<vmem>>, vector<1x16x98xf32>
    %14 = vector.shape_cast %13 : vector<1x16x98xf32> to vector<16x98xf32>
    %15 = arith.mulf %14, %7 : vector<16x98xf32>
    %cst_12 = arith.constant dense<0.000000e+00> : vector<98xf32>
    %16 = vector.multi_reduction <add>, %15, %cst_12 [0] : vector<16x98xf32> to vector<98xf32>
    %17 = vector.shape_cast %16 : vector<98xf32> to vector<1x98xf32>
    %c2 = arith.constant 2 : index
    %c0_13 = arith.constant 0 : index
    %c0_14 = arith.constant 0 : index
    %18 = vector.load %arg4[%c2, %c0_13, %c0_14] : memref<8x16x98xf32, #tpu.memory_space<vmem>>, vector<1x16x98xf32>
    %19 = vector.shape_cast %18 : vector<1x16x98xf32> to vector<16x98xf32>
    %20 = arith.mulf %19, %7 : vector<16x98xf32>
    %cst_15 = arith.constant dense<0.000000e+00> : vector<98xf32>
    %21 = vector.multi_reduction <add>, %20, %cst_15 [0] : vector<16x98xf32> to vector<98xf32>
    %22 = vector.shape_cast %21 : vector<98xf32> to vector<1x98xf32>
    %c3 = arith.constant 3 : index
    %c0_16 = arith.constant 0 : index
    %c0_17 = arith.constant 0 : index
    %23 = vector.load %arg4[%c3, %c0_16, %c0_17] : memref<8x16x98xf32, #tpu.memory_space<vmem>>, vector<1x16x98xf32>
    %24 = vector.shape_cast %23 : vector<1x16x98xf32> to vector<16x98xf32>
    %25 = arith.mulf %24, %7 : vector<16x98xf32>
    %cst_18 = arith.constant dense<0.000000e+00> : vector<98xf32>
    %26 = vector.multi_reduction <add>, %25, %cst_18 [0] : vector<16x98xf32> to vector<98xf32>
    %27 = vector.shape_cast %26 : vector<98xf32> to vector<1x98xf32>
    %c4 = arith.constant 4 : index
    %c0_19 = arith.constant 0 : index
    %c0_20 = arith.constant 0 : index
    %28 = vector.load %arg4[%c4, %c0_19, %c0_20] : memref<8x16x98xf32, #tpu.memory_space<vmem>>, vector<1x16x98xf32>
    %29 = vector.shape_cast %28 : vector<1x16x98xf32> to vector<16x98xf32>
    %30 = arith.mulf %29, %7 : vector<16x98xf32>
    %cst_21 = arith.constant dense<0.000000e+00> : vector<98xf32>
    %31 = vector.multi_reduction <add>, %30, %cst_21 [0] : vector<16x98xf32> to vector<98xf32>
    %32 = vector.shape_cast %31 : vector<98xf32> to vector<1x98xf32>
    %c5 = arith.constant 5 : index
    %c0_22 = arith.constant 0 : index
    %c0_23 = arith.constant 0 : index
    %33 = vector.load %arg4[%c5, %c0_22, %c0_23] : memref<8x16x98xf32, #tpu.memory_space<vmem>>, vector<1x16x98xf32>
    %34 = vector.shape_cast %33 : vector<1x16x98xf32> to vector<16x98xf32>
    %35 = arith.mulf %34, %7 : vector<16x98xf32>
    %cst_24 = arith.constant dense<0.000000e+00> : vector<98xf32>
    %36 = vector.multi_reduction <add>, %35, %cst_24 [0] : vector<16x98xf32> to vector<98xf32>
    %37 = vector.shape_cast %36 : vector<98xf32> to vector<1x98xf32>
    %c6 = arith.constant 6 : index
    %c0_25 = arith.constant 0 : index
    %c0_26 = arith.constant 0 : index
    %38 = vector.load %arg4[%c6, %c0_25, %c0_26] : memref<8x16x98xf32, #tpu.memory_space<vmem>>, vector<1x16x98xf32>
    %39 = vector.shape_cast %38 : vector<1x16x98xf32> to vector<16x98xf32>
    %40 = arith.mulf %39, %7 : vector<16x98xf32>
    %cst_27 = arith.constant dense<0.000000e+00> : vector<98xf32>
    %41 = vector.multi_reduction <add>, %40, %cst_27 [0] : vector<16x98xf32> to vector<98xf32>
    %42 = vector.shape_cast %41 : vector<98xf32> to vector<1x98xf32>
    %c7 = arith.constant 7 : index
    %c0_28 = arith.constant 0 : index
    %c0_29 = arith.constant 0 : index
    %43 = vector.load %arg4[%c7, %c0_28, %c0_29] : memref<8x16x98xf32, #tpu.memory_space<vmem>>, vector<1x16x98xf32>
    %44 = vector.shape_cast %43 : vector<1x16x98xf32> to vector<16x98xf32>
    %45 = arith.mulf %44, %7 : vector<16x98xf32>
    %cst_30 = arith.constant dense<0.000000e+00> : vector<98xf32>
    %46 = vector.multi_reduction <add>, %45, %cst_30 [0] : vector<16x98xf32> to vector<98xf32>
    %47 = vector.shape_cast %46 : vector<98xf32> to vector<1x98xf32>
    %48 = tpu.concatenate %12, %17, %22, %27, %32, %37, %42, %47 in 0 : vector<1x98xf32>, vector<1x98xf32>, vector<1x98xf32>, vector<1x98xf32>, vector<1x98xf32>, vector<1x98xf32>, vector<1x98xf32>, vector<1x98xf32> -> vector<8x98xf32>
    %c0_31 = arith.constant 0 : index
    %c0_32 = arith.constant 0 : index
    %49 = vector.load %arg5[%c0_31, %c0_32] : memref<98x2xf32, #tpu.memory_space<vmem>>, vector<98x2xf32>
    %cst_33 = arith.constant dense<0.000000e+00> : vector<8x2xf32>
    %50 = tpu.matmul %48, %49, %cst_33 {dimension_numbers = #tpu.dot_dimension_numbers<[1], [0], [0], [1], [0, 0, 1, 1], [], []>} : vector<8x98xf32>, vector<98x2xf32>, vector<8x2xf32> -> vector<8x2xf32>
    %c0_34 = arith.constant 0 : index
    %c0_35 = arith.constant 0 : index
    %51 = vector.load %arg6[%c0_34, %c0_35] : memref<8x1xf32, #tpu.memory_space<vmem>>, vector<8x1xf32>
    %52 = vector.broadcast %51 : vector<8x1xf32> to vector<8x2xf32>
    %53 = arith.addf %50, %52 : vector<8x2xf32>
    %54 = math.absf %53 : vector<8x2xf32>
    %cst_36 = arith.constant dense<0xFF800000> : vector<2xf32>
    %55 = vector.multi_reduction <maximumf>, %54, %cst_36 [0] : vector<8x2xf32> to vector<2xf32>
    %56 = vector.shape_cast %55 : vector<2xf32> to vector<1x2xf32>
    %57 = vector.broadcast %56 : vector<1x2xf32> to vector<8x2xf32>
    %58 = arith.subf %54, %57 : vector<8x2xf32>
    %59 = math.exp %58 : vector<8x2xf32>
    %cst_37 = arith.constant dense<0.000000e+00> : vector<2xf32>
    %60 = vector.multi_reduction <add>, %59, %cst_37 [0] : vector<8x2xf32> to vector<2xf32>
    %61 = vector.shape_cast %60 : vector<2xf32> to vector<1x2xf32>
    %62 = vector.broadcast %61 : vector<1x2xf32> to vector<8x2xf32>
    %63 = arith.divf %59, %62 : vector<8x2xf32>
    %c0_38 = arith.constant 0 : index
    %c0_39 = arith.constant 0 : index
    %64 = vector.load %arg7[%c0_38, %c0_39] : memref<8x2xf32, #tpu.memory_space<vmem>>, vector<8x2xf32>
    tpu.vector_store %arg7[%c0_38, %c0_39], %63 {strides = array<i32>} : memref<8x2xf32, #tpu.memory_space<vmem>>, vector<8x2xf32>,
    return
  }
  func.func @transform_0(%arg0: i32) -> (i32, i32) {
    %c0_i32 = arith.constant 0 : i32
    %c0_i32_0 = arith.constant 0 : i32
    %c0_i32_1 = arith.constant 0 : i32
    return %c0_i32, %c0_i32_0 : i32, i32
  }
  func.func @transform_1(%arg0: i32) -> (i32, i32) {
    %c0_i32 = arith.constant 0 : i32
    %c0_i32_0 = arith.constant 0 : i32
    %c0_i32_1 = arith.constant 0 : i32
    return %c0_i32, %c0_i32_0 : i32, i32
  }
  func.func @transform_2(%arg0: i32) -> (i32, i32) {
    %c0_i32 = arith.constant 0 : i32
    %c0_i32_0 = arith.constant 0 : i32
    %c0_i32_1 = arith.constant 0 : i32
    return %c0_i32, %c0_i32_0 : i32, i32
  }
  func.func @transform_3(%arg0: i32) -> (i32, i32, i32) {
    %c0_i32 = arith.constant 0 : i32
    %c0_i32_0 = arith.constant 0 : i32
    %c0_i32_1 = arith.constant 0 : i32
    %c0_i32_2 = arith.constant 0 : i32
    return %c0_i32, %c0_i32_0, %c0_i32_1 : i32, i32, i32
  }
  func.func @transform_4(%arg0: i32) -> (i32, i32) {
    %c0_i32 = arith.constant 0 : i32
    %c0_i32_0 = arith.constant 0 : i32
    %c0_i32_1 = arith.constant 0 : i32
    return %c0_i32, %c0_i32_0 : i32, i32
  }
  func.func @transform_5(%arg0: i32) -> (i32, i32) {
    %c0_i32 = arith.constant 0 : i32
    %c0_i32_0 = arith.constant 0 : i32
    %c0_i32_1 = arith.constant 0 : i32
    return %c0_i32, %c0_i32_0 : i32, i32
  }
  func.func @transform_6(%arg0: i32) -> (i32, i32) {
    %c0_i32 = arith.constant 0 : i32
    %c0_i32_0 = arith.constant 0 : i32
    %c0_i32_1 = arith.constant 0 : i32
    return %c0_i32, %c0_i32_0 : i32, i32
  }
}

</mosaic_0001>

<llo_original>
// kernel: action_conv_attention_encoder.3
$region0: #{action_conv_attention_encoder.3}
  #allocation0 [shape = 'u32[]', space=smem, size = 0x4, offset = 0x4, fixed_abs, tag = 'smem constant byte address 0x4 - core index']
  #allocation1 [shape = 'u32[72,128]{1,0:T(1,128)}', space=vmem, size = 0x9000, scoped, tag = 'internal scratch']
  %s0 = inlined_call_operand.vmem [shape: bf16[32,54], index: 0, kind: input, shape index: {}]
  %s1 = inlined_call_operand.vmem [shape: f32[32,1], index: 1, kind: input, shape index: {}]
  %s2 = inlined_call_operand.vmem [shape: bf16[54,1922], index: 2, kind: input, shape index: {}]
  %s3 = inlined_call_operand.vmem [shape: bf16[32,1922], index: 3, kind: output, shape index: {}]
  %s4 = sld [smem:[#allocation0]]
  $region87: #{action_conv_attention_encoder.3} parent=0
    _
  %s6 = ssub.s32 1, %s4
  %s7 = scalar_select 0, %s6, %s4
  $region1: #{action_conv_attention_encoder.3} parent=0
    #allocation2 [shape = 'u8[229376]{0}', space=vmem, size = 0x38000, scoped, tag = 'input window, operand 2']
    #allocation3 [shape = 'u8[131072]{0}', space=vmem, size = 0x20000, scoped, tag = 'output window, operand 0']
    loop: start=0, step=1, limit=4
    $region2: #{action_conv_attention_encoder.3} parent=1 // loop_pre_header
      _
    $region3: #{action_conv_attention_encoder.3} parent=1 // loop_header
      %s9 = sphi 0, %s13
      %p10 = scmp.ge.s32.totalorder %s9, 4
      %s17 = sphi 0, %s17
      %s19 = sphi 0, %s17
      %s20 = sphi 0, %s19
      %s34 = sphi 0, %s20
      %s38 = sphi 0, %s38
      %s40 = sphi 0, %s38
      %s41 = sphi 0, %s40
      %s55 = sphi 0, %s41
      %s61 = sphi 0, %s63
      %s64 = sphi 0, %s61
      %s65 = sphi 0, %s64
      %s81 = sphi 0, %s65
      %s87 = sphi 0, %s89
      %s90 = sphi 0, %s87
      %s91 = sphi 0, %s90
      %s107 = sphi 0, %s91
    $region4: #{action_conv_attention_encoder.3} parent=1 // loop_header_branch
      %12 = sbr.rel (%p10) target = $region8
    $region5: #{action_conv_attention_encoder.3} parent=1 // loop_body
      %s14 = ssub.s32 %s9, 1
      %s15 = ssub.s32 %s9, 2
      %s16 = sadd.s32 %s9, 1
      %s18 = sadd.s32 %s17, 1
      %p21 = scmp.eq.s32.totalorder %s9, 1
      %p22 = scmp.ne.s32.totalorder %s17, %s19
      %p23 = scmp.eq.s32.totalorder %s9, 0
      %p24 = por %p22, %p23
      %p25 = scmp.ne.s32.totalorder %s17, %s19
      %p26 = scmp.eq.s32.totalorder %s14, 1
      %p27 = por %p25, %p26
      %p28 = scmp.ne.s32.totalorder %s19, %s20
      %p29 = scmp.eq.s32.totalorder %s14, 0
      %p30 = por %p28, %p29
      %p31 = scmp.ne.s32.totalorder %s19, %s20
      %p32 = scmp.eq.s32.totalorder %s15, 1
      %p33 = por %p31, %p32
      %p35 = scmp.ne.s32.totalorder %s20, %s34
      %p36 = scmp.eq.s32.totalorder %s15, 0
      %p37 = por %p35, %p36
      %s39 = sadd.s32 %s38, 1
      %p42 = scmp.eq.s32.totalorder %s9, 1
      %p43 = scmp.ne.s32.totalorder %s38, %s40
      %p44 = scmp.eq.s32.totalorder %s9, 0
      %p45 = por %p43, %p44
      %p46 = scmp.ne.s32.totalorder %s38, %s40
      %p47 = scmp.eq.s32.totalorder %s14, 1
      %p48 = por %p46, %p47
      %p49 = scmp.ne.s32.totalorder %s40, %s41
      %p50 = scmp.eq.s32.totalorder %s14, 0
      %p51 = por %p49, %p50
      %p52 = scmp.ne.s32.totalorder %s40, %s41
      %p53 = scmp.eq.s32.totalorder %s15, 1
      %p54 = por %p52, %p53
      %p56 = scmp.ne.s32.totalorder %s41, %s55
      %p57 = scmp.eq.s32.totalorder %s15, 0
      %p58 = por %p56, %p57
      %s59 = ssub.s32 %s9, %s16
      %p60 = scmp.eq.s32.totalorder %s59, 0
      %s62 = sadd.s32 %s61, 1
      %s63 = scalar_select %p60, %s61, %s62
      %p66 = pneg %p60
      %p67 = scmp.eq.s32.totalorder %s9, 1
      %p68 = por %p66, %p67
      %p69 = scmp.ne.s32.totalorder %s61, %s64
      %p70 = scmp.eq.s32.totalorder %s9, 0
      %p71 = por %p69, %p70
      %p72 = scmp.ne.s32.totalorder %s61, %s64
      %p73 = scmp.eq.s32.totalorder %s14, 1
      %p74 = por %p72, %p73
      %p75 = scmp.ne.s32.totalorder %s64, %s65
      %p76 = scmp.eq.s32.totalorder %s14, 0
      %p77 = por %p75, %p76
      %p78 = scmp.ne.s32.totalorder %s64, %s65
      %p79 = scmp.eq.s32.totalorder %s15, 1
      %p80 = por %p78, %p79
      %p82 = scmp.ne.s32.totalorder %s65, %s81
      %p83 = scmp.eq.s32.totalorder %s15, 0
      %p84 = por %p82, %p83
      %s85 = ssub.s32 %s9, %s16
      %p86 = scmp.eq.s32.totalorder %s85, 0
      %s88 = sadd.s32 %s87, 1
      %s89 = scalar_select %p86, %s87, %s88
      %p92 = pneg %p86
      %p93 = scmp.eq.s32.totalorder %s9, 1
      %p94 = por %p92, %p93
      %p95 = scmp.ne.s32.totalorder %s87, %s90
      %p96 = scmp.eq.s32.totalorder %s9, 0
      %p97 = por %p95, %p96
      %p98 = scmp.ne.s32.totalorder %s87, %s90
      %p99 = scmp.eq.s32.totalorder %s14, 1
      %p100 = por %p98, %p99
      %p101 = scmp.ne.s32.totalorder %s90, %s91
      %p102 = scmp.eq.s32.totalorder %s14, 0
      %p103 = por %p101, %p102
      %p104 = scmp.ne.s32.totalorder %s90, %s91
      %p105 = scmp.eq.s32.totalorder %s15, 1
      %p106 = por %p104, %p105
      %p108 = scmp.ne.s32.totalorder %s91, %s107
      %p109 = scmp.eq.s32.totalorder %s15, 0
      %p110 = por %p108, %p109
      %p111 = scmp.le.s32.totalorder 1, %s9
      %p112 = scmp.lt.s32.totalorder %s9, 3
      %p113 = pnand %p111, %p112
      %p114 = pneg %p113
      // Predicated region
      $region9: #{action_conv_attention_encoder.3} parent=5 // pred_check
        _
      $region10: #{action_conv_attention_encoder.3} parent=5 // pred_check_branch
        %116 = sbr.rel (%p113) target = $region12
      $region11: #{action_conv_attention_encoder.3} parent=5 // pred_region
        %s117 = ssub.s32 %s9, 1
        // Predicated region
        $region13: #{action_conv_attention_encoder.3} parent=11 // pred_check
          %p118 = pneg %p30
        $region14: #{action_conv_attention_encoder.3} parent=11 // pred_check_branch
          %120 = sbr.rel (%p118) target = $region16
        $region15: #{action_conv_attention_encoder.3} parent=11 // pred_region
          _
        $region16: #{action_conv_attention_encoder.3} parent=11 // pred_fallthru
          _
        // Predicated region
        $region17: #{action_conv_attention_encoder.3} parent=11 // pred_check
          %p121 = pneg %p51
        $region18: #{action_conv_attention_encoder.3} parent=11 // pred_check_branch
          %123 = sbr.rel (%p121) target = $region20
        $region19: #{action_conv_attention_encoder.3} parent=11 // pred_region
          _
        $region20: #{action_conv_attention_encoder.3} parent=11 // pred_fallthru
          _
      $region12: #{action_conv_attention_encoder.3} parent=5 // pred_fallthru
        _
      %p124 = scmp.lt.s32.totalorder %s9, 2
      // Predicated region
      $region21: #{action_conv_attention_encoder.3} parent=5 // pred_check
        %p125 = pneg %p124
      $region22: #{action_conv_attention_encoder.3} parent=5 // pred_check_branch
        %127 = sbr.rel (%p125) target = $region24
      $region23: #{action_conv_attention_encoder.3} parent=5 // pred_region
        // Predicated region
        $region25: #{action_conv_attention_encoder.3} parent=23 // pred_check
          %p128 = pneg %p71
        $region26: #{action_conv_attention_encoder.3} parent=23 // pred_check_branch
          %130 = sbr.rel (%p128) target = $region28
        $region27: #{action_conv_attention_encoder.3} parent=23 // pred_region
          %s131 = sand.u32 %s61, 1
          %s132 = sand.u32 %s61, 1
          %s133 = smul.addr %s132, 224
          %s134 = scalar_lea.vmem [#allocation2], %s133
          %s135 = smul.u32 8, %s9
          %s136 = smul.addr %s135, 4
          %s137 = scalar_lea.vmem %s2, %s136
          // Predicated region
          $region29: #{action_conv_attention_encoder.3} parent=27 // pred_check
            _
          $region30: #{action_conv_attention_encoder.3} parent=27 // pred_check_branch
            %139 = sbr.rel (0) target = $region32
          $region31: #{action_conv_attention_encoder.3} parent=27 // pred_region
            // Predicated region
            $region33: #{action_conv_attention_encoder.3} parent=31 // pred_check
              _
            $region34: #{action_conv_attention_encoder.3} parent=31 // pred_check_branch
              %141 = sbr.rel (0) target = $region36
            $region35: #{action_conv_attention_encoder.3} parent=31 // pred_region
              loop: start=0, step=1, limit=1
              $region37: #{action_conv_attention_encoder.3} parent=35 // loop_pre_header
                _
              $region38: #{action_conv_attention_encoder.3} parent=35 // loop_header
                %s143 = sphi 0, %s147
                %p144 = scmp.ge.s32.totalorder %s143, 1
                %s148 = sphi %s137, %s137
                %s149 = sphi %s134, %s134
              $region39: #{action_conv_attention_encoder.3} parent=35 // loop_header_branch
                %146 = sbr.rel (%p144) target = $region43
              $region40: #{action_conv_attention_encoder.3} parent=35 // loop_body
                %v150 = vld [vmem:[%s148] sm:$0xff]
                %151 = vst [vmem:[%s149] sm:$0xff] %v150
                %v152 = vld [vmem:[%s148 + $0x8] sm:$0xff]
                %153 = vst [vmem:[%s149 + $0x8] sm:$0xff] %v152
                %v154 = vld [vmem:[%s148 + $0x10] sm:$0xff]
                %155 = vst [vmem:[%s149 + $0x10] sm:$0xff] %v154
                %v156 = vld [vmem:[%s148 + $0x18] sm:$0xff]
                %157 = vst [vmem:[%s149 + $0x18] sm:$0xff] %v156
                %v158 = vld [vmem:[%s148 + $0x40] sm:$0xff]
                %159 = vst [vmem:[%s149 + $0x20] sm:$0xff] %v158
                %v160 = vld [vmem:[%s148 + $0x48] sm:$0xff]
                %161 = vst [vmem:[%s149 + $0x28] sm:$0xff] %v160
                %v162 = vld [vmem:[%s148 + $0x50] sm:$0xff]
                %163 = vst [vmem:[%s149 + $0x30] sm:$0xff] %v162
                %v164 = vld [vmem:[%s148 + $0x58] sm:$0xff]
                %165 = vst [vmem:[%s149 + $0x38] sm:$0xff] %v164
                %v166 = vld [vmem:[%s148 + $0x80] sm:$0xff]
                %167 = vst [vmem:[%s149 + $0x40] sm:$0xff] %v166
                %v168 = vld [vmem:[%s148 + $0x88] sm:$0xff]
                %169 = vst [vmem:[%s149 + $0x48] sm:$0xff] %v168
                %v170 = vld [vmem:[%s148 + $0x90] sm:$0xff]
                %171 = vst [vmem:[%s149 + $0x50] sm:$0xff] %v170
                %v172 = vld [vmem:[%s148 + $0x98] sm:$0xff]
                %173 = vst [vmem:[%s149 + $0x58] sm:$0xff] %v172
                %v174 = vld [vmem:[%s148 + $0xc0] sm:$0xff]
                %175 = vst [vmem:[%s149 + $0x60] sm:$0xff] %v174
                %v176 = vld [vmem:[%s148 + $0xc8] sm:$0xff]
                %177 = vst [vmem:[%s149 + $0x68] sm:$0xff] %v176
                %v178 = vld [vmem:[%s148 + $0xd0] sm:$0xff]
                %179 = vst [vmem:[%s149 + $0x70] sm:$0xff] %v178
                %v180 = vld [vmem:[%s148 + $0xd8] sm:$0xff]
                %181 = vst [vmem:[%s149 + $0x78] sm:$0xff] %v180
                %v182 = vld [vmem:[%s148 + $0x100] sm:$0xff]
                %183 = vst [vmem:[%s149 + $0x80] sm:$0xff] %v182
                %v184 = vld [vmem:[%s148 + $0x108] sm:$0xff]
                %185 = vst [vmem:[%s149 + $0x88] sm:$0xff] %v184
                %v186 = vld [vmem:[%s148 + $0x110] sm:$0xff]
                %187 = vst [vmem:[%s149 + $0x90] sm:$0xff] %v186
                %v188 = vld [vmem:[%s148 + $0x118] sm:$0xff]
                %189 = vst [vmem:[%s149 + $0x98] sm:$0xff] %v188
                %v190 = vld [vmem:[%s148 + $0x140] sm:$0xff]
                %191 = vst [vmem:[%s149 + $0xa0] sm:$0xff] %v190
                %v192 = vld [vmem:[%s148 + $0x148] sm:$0xff]
                %193 = vst [vmem:[%s149 + $0xa8] sm:$0xff] %v192
                %v194 = vld [vmem:[%s148 + $0x150] sm:$0xff]
                %195 = vst [vmem:[%s149 + $0xb0] sm:$0xff] %v194
                %v196 = vld [vmem:[%s148 + $0x158] sm:$0xff]
                %197 = vst [vmem:[%s149 + $0xb8] sm:$0xff] %v196
                %v198 = vld [vmem:[%s148 + $0x180] sm:$0xff]
                %199 = vst [vmem:[%s149 + $0xc0] sm:$0xff] %v198
                %v200 = vld [vmem:[%s148 + $0x188] sm:$0xff]
                %201 = vst [vmem:[%s149 + $0xc8] sm:$0xff] %v200
                %v202 = vld [vmem:[%s148 + $0x190] sm:$0xff]
                %203 = vst [vmem:[%s149 + $0xd0] sm:$0xff] %v202
                %v204 = vld [vmem:[%s148 + $0x198] sm:$0xff]
                %205 = vst [vmem:[%s149 + $0xd8] sm:$0xff] %v204
              $region41: #{action_conv_attention_encoder.3} parent=35 // loop_footer
                %s147 = sadd.s32 1, %s143
              $region42: #{action_conv_attention_encoder.3} parent=35 // loop_footer_branch
                %142 = sbr.rel target = $region38
              $region43: #{action_conv_attention_encoder.3} parent=35 // loop_exit
                _
            $region36: #{action_conv_attention_encoder.3} parent=31 // pred_fallthru
              _
            // Predicated region
            $region44: #{action_conv_attention_encoder.3} parent=31 // pred_check
              _
            $region45: #{action_conv_attention_encoder.3} parent=31 // pred_check_branch
              %207 = sbr.rel target = $region47
            $region46: #{action_conv_attention_encoder.3} parent=31 // pred_region
              _
            $region47: #{action_conv_attention_encoder.3} parent=31 // pred_fallthru
              _
          $region32: #{action_conv_attention_encoder.3} parent=27 // pred_fallthru
            _
          %208 = vnop
        $region28: #{action_conv_attention_encoder.3} parent=23 // pred_fallthru
          _
      $region24: #{action_conv_attention_encoder.3} parent=5 // pred_fallthru
        _
      %p209 = scmp.le.s32.totalorder 1, %s9
      %p210 = scmp.lt.s32.totalorder %s9, 3
      %p211 = pnand %p209, %p210
      %p212 = pneg %p211
      // Predicated region
      $region48: #{action_conv_attention_encoder.3} parent=5 // pred_check
        _
      $region49: #{action_conv_attention_encoder.3} parent=5 // pred_check_branch
        %214 = sbr.rel (%p211) target = $region51
      $region50: #{action_conv_attention_encoder.3} parent=5 // pred_region
        %s215 = ssub.s32 %s9, 1
        %s216 = sand.u32 %s64, 1
        %s217 = sand.u32 %s64, 1
        %s218 = smul.addr %s217, 224
        %s219 = scalar_lea.vmem [#allocation2], %s218
        // Predicated region
        $region52: #{action_conv_attention_encoder.3} parent=50 // pred_check
          %p220 = pneg %p77
        $region53: #{action_conv_attention_encoder.3} parent=50 // pred_check_branch
          %222 = sbr.rel (%p220) target = $region55
        $region54: #{action_conv_attention_encoder.3} parent=50 // pred_region
          _
        $region55: #{action_conv_attention_encoder.3} parent=50 // pred_fallthru
          _
        %p223 = pneg %p30
        %p224 = pneg %p27
        %p225 = pneg %p51
        %p226 = pneg %p48
        %s227 = sand.u32 %s64, 1
        %s228 = sand.u32 %s64, 1
        %s229 = smul.addr %s228, 224
        %s230 = scalar_lea.vmem [#allocation2], %s229
        %p231 = pneg %p77
        %p232 = pneg %p74
        %p233 = pneg %p103
        %p234 = pneg %p100
        %s235 = sand.u32 %s90, 1
        %s236 = sand.u32 %s90, 1
        %s237 = smul.addr %s236, 128
        %s238 = scalar_lea.vmem [#allocation3], %s237
        %s239 = smul.u32 8, %s14
        %s240 = smul.u32 8, %s14
        %v242 = vld [vmem:[%s0] sm:$0xf]
        %v243 = vld [vmem:[%s0 + $0x4] sm:$0xf]
        %v244 = vld [vmem:[%s0 + $0x8] sm:$0xf]
        %v245 = vld [vmem:[%s0 + $0xc] sm:$0xf]
        %v246 = vld [vmem:[%s219] sm:$0xff]
        %v247 = vld [vmem:[%s219 + $0x8] sm:$0xff]
        %v248 = vld [vmem:[%s219 + $0x10] sm:$0xff]
        %v249 = vld [vmem:[%s219 + $0x18] sm:$0xff]
        %v250 = vld [vmem:[%s219 + $0x20] sm:$0xff]
        %v251 = vld [vmem:[%s219 + $0x28] sm:$0xff]
        %v252 = vld [vmem:[%s219 + $0x30] sm:$0xff]
        %v253 = vld [vmem:[%s219 + $0x38] sm:$0xff]
        %v254 = vld [vmem:[%s219 + $0x40] sm:$0xff]
        %v255 = vld [vmem:[%s219 + $0x48] sm:$0xff]
        %v256 = vld [vmem:[%s219 + $0x50] sm:$0xff]
        %v257 = vld [vmem:[%s219 + $0x58] sm:$0xff]
        %v258 = vld [vmem:[%s219 + $0x60] sm:$0xff]
        %v259 = vld [vmem:[%s219 + $0x68] sm:$0xff]
        %v260 = vld [vmem:[%s219 + $0x70] sm:$0xff]
        %v261 = vld [vmem:[%s219 + $0x78] sm:$0xff]
        %v262 = vld [vmem:[%s219 + $0x80] sm:$0xff]
        %v263 = vld [vmem:[%s219 + $0x88] sm:$0xff]
        %v264 = vld [vmem:[%s219 + $0x90] sm:$0xff]
        %v265 = vld [vmem:[%s219 + $0x98] sm:$0xff]
        %v266 = vld [vmem:[%s219 + $0xa0] sm:$0xff]
        %v267 = vld [vmem:[%s219 + $0xa8] sm:$0xff]
        %v268 = vld [vmem:[%s219 + $0xb0] sm:$0xff]
        %v269 = vld [vmem:[%s219 + $0xb8] sm:$0xff]
        %v270 = vld [vmem:[%s219 + $0xc0] sm:$0x77]
        %v271 = vld [vmem:[%s219 + $0xc8] sm:$0x77]
        %v272 = vld [vmem:[%s219 + $0xd0] sm:$0x77]
        %v273 = vld [vmem:[%s219 + $0xd8] sm:$0x77]
        %v274 = vld [vmem:[%s1] sm:$0xff]
        %v275 = vld [vmem:[%s1 + $0x8] sm:$0xff]
        %v276 = vld [vmem:[%s1 + $0x10] sm:$0xff]
        %v277 = vld [vmem:[%s1 + $0x18] sm:$0xff]
        %279 = vset.pattern.permute.xlu0 0
        %280 = vperm.xlu0 %279, %v274
        %v281 = vpop.permute.xlu0 %280
        %284 = vset.pattern.permute.xlu0 0
        %285 = vperm.xlu0 %284, %v275
        %v286 = vpop.permute.xlu0 %285
        %289 = vset.pattern.permute.xlu0 0
        %290 = vperm.xlu0 %289, %v276
        %v291 = vpop.permute.xlu0 %290
        %294 = vset.pattern.permute.xlu0 0
        %295 = vperm.xlu0 %294, %v277
        %v296 = vpop.permute.xlu0 %295
        %v302 = vunpack.c.l.b16 %v242
        %v303 = vunpack.c.l.b16 %v243
        %v304 = vunpack.c.l.b16 %v244
        %v305 = vunpack.c.l.b16 %v245
        %v306 = vpack.c.b16 %v303, %v302
        %v307 = vpack.c.b16 %v305, %v304
        %v336 = vunpack.c.l.b16 %v246
        %v337 = vunpack.c.h.b16 %v246
        %v338 = vunpack.c.l.b16 %v247
        %v339 = vunpack.c.h.b16 %v247
        %v340 = vunpack.c.l.b16 %v248
        %v341 = vunpack.c.h.b16 %v248
        %v342 = vunpack.c.l.b16 %v249
        %v343 = vunpack.c.h.b16 %v249
        %v344 = vunpack.c.l.b16 %v250
        %v345 = vunpack.c.h.b16 %v250
        %v346 = vunpack.c.l.b16 %v251
        %v347 = vunpack.c.h.b16 %v251
        %v348 = vunpack.c.l.b16 %v252
        %v349 = vunpack.c.h.b16 %v252
        %v350 = vunpack.c.l.b16 %v253
        %v351 = vunpack.c.h.b16 %v253
        %v352 = vunpack.c.l.b16 %v254
        %v353 = vunpack.c.h.b16 %v254
        %v354 = vunpack.c.l.b16 %v255
        %v355 = vunpack.c.h.b16 %v255
        %v356 = vunpack.c.l.b16 %v256
        %v357 = vunpack.c.h.b16 %v256
        %v358 = vunpack.c.l.b16 %v257
        %v359 = vunpack.c.h.b16 %v257
        %v360 = vunpack.c.l.b16 %v258
        %v361 = vunpack.c.h.b16 %v258
        %v362 = vunpack.c.l.b16 %v259
        %v363 = vunpack.c.h.b16 %v259
        %v364 = vunpack.c.l.b16 %v260
        %v365 = vunpack.c.h.b16 %v260
        %v366 = vunpack.c.l.b16 %v261
        %v367 = vunpack.c.h.b16 %v261
        %v368 = vunpack.c.l.b16 %v262
        %v369 = vunpack.c.h.b16 %v262
        %v370 = vunpack.c.l.b16 %v263
        %v371 = vunpack.c.h.b16 %v263
        %v372 = vunpack.c.l.b16 %v264
        %v373 = vunpack.c.h.b16 %v264
        %v374 = vunpack.c.l.b16 %v265
        %v375 = vunpack.c.h.b16 %v265
        %v376 = vunpack.c.l.b16 %v266
        %v377 = vunpack.c.h.b16 %v266
        %v378 = vunpack.c.l.b16 %v267
        %v379 = vunpack.c.h.b16 %v267
        %v380 = vunpack.c.l.b16 %v268
        %v381 = vunpack.c.h.b16 %v268
        %v382 = vunpack.c.l.b16 %v269
        %v383 = vunpack.c.h.b16 %v269
        %v384 = vunpack.c.l.b16 %v270
        %v385 = vunpack.c.h.b16 %v270
        %v386 = vunpack.c.l.b16 %v271
        %v387 = vunpack.c.h.b16 %v271
        %v388 = vunpack.c.l.b16 %v272
        %v389 = vunpack.c.h.b16 %v272
        %v390 = vunpack.c.l.b16 %v273
        %v391 = vunpack.c.h.b16 %v273
        %v392 = vpack.c.b16 %v344, %v336
        %v393 = vpack.c.b16 %v345, %v337
        %v394 = vpack.c.b16 %v346, %v338
        %v395 = vpack.c.b16 %v347, %v339
        %v396 = vpack.c.b16 %v348, %v340
        %v397 = vpack.c.b16 %v349, %v341
        %v398 = vpack.c.b16 %v350, %v342
        %v399 = vpack.c.b16 %v351, %v343
        %v400 = vpack.c.b16 %v360, %v352
        %v401 = vpack.c.b16 %v361, %v353
        %v402 = vpack.c.b16 %v362, %v354
        %v403 = vpack.c.b16 %v363, %v355
        %v404 = vpack.c.b16 %v364, %v356
        %v405 = vpack.c.b16 %v365, %v357
        %v406 = vpack.c.b16 %v366, %v358
        %v407 = vpack.c.b16 %v367, %v359
        %v408 = vpack.c.b16 %v376, %v368
        %v409 = vpack.c.b16 %v377, %v369
        %v410 = vpack.c.b16 %v378, %v370
        %v411 = vpack.c.b16 %v379, %v371
        %v412 = vpack.c.b16 %v380, %v372
        %v413 = vpack.c.b16 %v381, %v373
        %v414 = vpack.c.b16 %v382, %v374
        %v415 = vpack.c.b16 %v383, %v375
        %v416 = vpack.c.b16 %v384, %v384
        %v417 = vpack.c.b16 %v385, %v385
        %v418 = vpack.c.b16 %v386, %v386
        %v419 = vpack.c.b16 %v387, %v387
        %v420 = vpack.c.b16 %v388, %v388
        %v421 = vpack.c.b16 %v389, %v389
        %v422 = vpack.c.b16 %v390, %v390
        %v423 = vpack.c.b16 %v391, %v391
        %vm448 = vcmask 441344
        %v450 = vsel %vm448, %v306, 0
        %v453 = vsel %vm448, %v307, 0
        %vm455 = vcmask 1042432
        %v457 = vsel %vm455, %v416, 0
        %v460 = vsel %vm455, %v417, 0
        %v463 = vsel %vm455, %v418, 0
        %v466 = vsel %vm455, %v419, 0
        %v469 = vsel %vm455, %v420, 0
        %v472 = vsel %vm455, %v421, 0
        %v475 = vsel %vm455, %v422, 0
        %v478 = vsel %vm455, %v423, 0
        %480 = vmatpush.bf16.msra.mxu0 0
        %481 = vmatpush.bf16.msra.mxu0 0
        %482 = vmatpush.bf16.msra.mxu0 0
        %483 = vmatpush.bf16.msra.mxu0 0
        %484 = vmatpush.bf16.msra.mxu0 %v457
        %485 = vmatpush.bf16.msra.mxu0 %v408
        %486 = vmatpush.bf16.msra.mxu0 %v400
        %487 = vmatpush.bf16.msra.mxu0 %v392
        %488 = vmatmul.bf16.gmra.mxu0 %v450
        %v489 = vpop.f32.mrf.mxu0
        %v490 = vadd.f32 %v281, %v489
        %v491 = vpop.f32.mrf.mxu0
        %v492 = vadd.f32 %v286, %v491
        %493 = vmatmul.bf16.gmra.mxu0 %v453
        %v494 = vpop.f32.mrf.mxu0
        %v495 = vadd.f32 %v291, %v494
        %v496 = vpop.f32.mrf.mxu0
        %v497 = vadd.f32 %v296, %v496
        %498 = vdwg.mxu0
        %499 = vmatpush.bf16.msra.mxu0 0
        %500 = vmatpush.bf16.msra.mxu0 0
        %501 = vmatpush.bf16.msra.mxu0 0
        %502 = vmatpush.bf16.msra.mxu0 0
        %503 = vmatpush.bf16.msra.mxu0 %v460
        %504 = vmatpush.bf16.msra.mxu0 %v409
        %505 = vmatpush.bf16.msra.mxu0 %v401
        %506 = vmatpush.bf16.msra.mxu0 %v393
        %507 = vmatmul.bf16.gmra.mxu0 %v450
        %v508 = vpop.f32.mrf.mxu0
        %v509 = vadd.f32 %v281, %v508
        %v510 = vpop.f32.mrf.mxu0
        %v511 = vadd.f32 %v286, %v510
        %512 = vmatmul.bf16.gmra.mxu0 %v453
        %v513 = vpop.f32.mrf.mxu0
        %v514 = vadd.f32 %v291, %v513
        %v515 = vpop.f32.mrf.mxu0
        %v516 = vadd.f32 %v296, %v515
        %517 = vdwg.mxu0
        %518 = vmatpush.bf16.msra.mxu0 0
        %519 = vmatpush.bf16.msra.mxu0 0
        %520 = vmatpush.bf16.msra.mxu0 0
        %521 = vmatpush.bf16.msra.mxu0 0
        %522 = vmatpush.bf16.msra.mxu0 %v463
        %523 = vmatpush.bf16.msra.mxu0 %v410
        %524 = vmatpush.bf16.msra.mxu0 %v402
        %525 = vmatpush.bf16.msra.mxu0 %v394
        %526 = vmatmul.bf16.gmra.mxu0 %v450
        %v527 = vpop.f32.mrf.mxu0
        %v528 = vadd.f32 %v281, %v527
        %v529 = vpop.f32.mrf.mxu0
        %v530 = vadd.f32 %v286, %v529
        %531 = vmatmul.bf16.gmra.mxu0 %v453
        %v532 = vpop.f32.mrf.mxu0
        %v533 = vadd.f32 %v291, %v532
        %v534 = vpop.f32.mrf.mxu0
        %v535 = vadd.f32 %v296, %v534
        %536 = vdwg.mxu0
        %537 = vmatpush.bf16.msra.mxu0 0
        %538 = vmatpush.bf16.msra.mxu0 0
        %539 = vmatpush.bf16.msra.mxu0 0
        %540 = vmatpush.bf16.msra.mxu0 0
        %541 = vmatpush.bf16.msra.mxu0 %v466
        %542 = vmatpush.bf16.msra.mxu0 %v411
        %543 = vmatpush.bf16.msra.mxu0 %v403
        %544 = vmatpush.bf16.msra.mxu0 %v395
        %545 = vmatmul.bf16.gmra.mxu0 %v450
        %v546 = vpop.f32.mrf.mxu0
        %v547 = vadd.f32 %v281, %v546
        %v548 = vpop.f32.mrf.mxu0
        %v549 = vadd.f32 %v286, %v548
        %550 = vmatmul.bf16.gmra.mxu0 %v453
        %v551 = vpop.f32.mrf.mxu0
        %v552 = vadd.f32 %v291, %v551
        %v553 = vpop.f32.mrf.mxu0
        %v554 = vadd.f32 %v296, %v553
        %555 = vdwg.mxu0
        %556 = vmatpush.bf16.msra.mxu0 0
        %557 = vmatpush.bf16.msra.mxu0 0
        %558 = vmatpush.bf16.msra.mxu0 0
        %559 = vmatpush.bf16.msra.mxu0 0
        %560 = vmatpush.bf16.msra.mxu0 %v469
        %561 = vmatpush.bf16.msra.mxu0 %v412
        %562 = vmatpush.bf16.msra.mxu0 %v404
        %563 = vmatpush.bf16.msra.mxu0 %v396
        %564 = vmatmul.bf16.gmra.mxu0 %v450
        %v565 = vpop.f32.mrf.mxu0
        %v566 = vadd.f32 %v281, %v565
        %v567 = vpop.f32.mrf.mxu0
        %v568 = vadd.f32 %v286, %v567
        %569 = vmatmul.bf16.gmra.mxu0 %v453
        %v570 = vpop.f32.mrf.mxu0
        %v571 = vadd.f32 %v291, %v570
        %v572 = vpop.f32.mrf.mxu0
        %v573 = vadd.f32 %v296, %v572
        %574 = vdwg.mxu0
        %575 = vmatpush.bf16.msra.mxu0 0
        %576 = vmatpush.bf16.msra.mxu0 0
        %577 = vmatpush.bf16.msra.mxu0 0
        %578 = vmatpush.bf16.msra.mxu0 0
        %579 = vmatpush.bf16.msra.mxu0 %v472
        %580 = vmatpush.bf16.msra.mxu0 %v413
        %581 = vmatpush.bf16.msra.mxu0 %v405
        %582 = vmatpush.bf16.msra.mxu0 %v397
        %583 = vmatmul.bf16.gmra.mxu0 %v450
        %v584 = vpop.f32.mrf.mxu0
        %v585 = vadd.f32 %v281, %v584
        %v586 = vpop.f32.mrf.mxu0
        %v587 = vadd.f32 %v286, %v586
        %588 = vmatmul.bf16.gmra.mxu0 %v453
        %v589 = vpop.f32.mrf.mxu0
        %v590 = vadd.f32 %v291, %v589
        %v591 = vpop.f32.mrf.mxu0
        %v592 = vadd.f32 %v296, %v591
        %593 = vdwg.mxu0
        %594 = vmatpush.bf16.msra.mxu0 0
        %595 = vmatpush.bf16.msra.mxu0 0
        %596 = vmatpush.bf16.msra.mxu0 0
        %597 = vmatpush.bf16.msra.mxu0 0
        %598 = vmatpush.bf16.msra.mxu0 %v475
        %599 = vmatpush.bf16.msra.mxu0 %v414
        %600 = vmatpush.bf16.msra.mxu0 %v406
        %601 = vmatpush.bf16.msra.mxu0 %v398
        %602 = vmatmul.bf16.gmra.mxu0 %v450
        %v603 = vpop.f32.mrf.mxu0
        %v604 = vadd.f32 %v281, %v603
        %v605 = vpop.f32.mrf.mxu0
        %v606 = vadd.f32 %v286, %v605
        %607 = vmatmul.bf16.gmra.mxu0 %v453
        %v608 = vpop.f32.mrf.mxu0
        %v609 = vadd.f32 %v291, %v608
        %v610 = vpop.f32.mrf.mxu0
        %v611 = vadd.f32 %v296, %v610
        %612 = vdwg.mxu0
        %613 = vmatpush.bf16.msra.mxu0 0
        %614 = vmatpush.bf16.msra.mxu0 0
        %615 = vmatpush.bf16.msra.mxu0 0
        %616 = vmatpush.bf16.msra.mxu0 0
        %617 = vmatpush.bf16.msra.mxu0 %v478
        %618 = vmatpush.bf16.msra.mxu0 %v415
        %619 = vmatpush.bf16.msra.mxu0 %v407
        %620 = vmatpush.bf16.msra.mxu0 %v399
        %621 = vmatmul.bf16.gmra.mxu0 %v450
        %v622 = vpop.f32.mrf.mxu0
        %v623 = vadd.f32 %v281, %v622
        %v624 = vpop.f32.mrf.mxu0
        %v625 = vadd.f32 %v286, %v624
        %626 = vmatmul.bf16.gmra.mxu0 %v453
        %v627 = vpop.f32.mrf.mxu0
        %v628 = vadd.f32 %v291, %v627
        %v629 = vpop.f32.mrf.mxu0
        %v630 = vadd.f32 %v296, %v629
        %631 = vdwg.mxu0
        %v632 = vmax.f32 %v490, 0.0
        %v633 = vmax.f32 %v509, 0.0
        %v634 = vmax.f32 %v528, 0.0
        %v635 = vmax.f32 %v547, 0.0
        %v636 = vmax.f32 %v566, 0.0
        %v637 = vmax.f32 %v585, 0.0
        %v638 = vmax.f32 %v604, 0.0
        %v639 = vmax.f32 %v623, 0.0
        %v640 = vmax.f32 %v492, 0.0
        %v641 = vmax.f32 %v511, 0.0
        %v642 = vmax.f32 %v530, 0.0
        %v643 = vmax.f32 %v549, 0.0
        %v644 = vmax.f32 %v568, 0.0
        %v645 = vmax.f32 %v587, 0.0
        %v646 = vmax.f32 %v606, 0.0
        %v647 = vmax.f32 %v625, 0.0
        %v648 = vmax.f32 %v495, 0.0
        %v649 = vmax.f32 %v514, 0.0
        %v650 = vmax.f32 %v533, 0.0
        %v651 = vmax.f32 %v552, 0.0
        %v652 = vmax.f32 %v571, 0.0
        %v653 = vmax.f32 %v590, 0.0
        %v654 = vmax.f32 %v609, 0.0
        %v655 = vmax.f32 %v628, 0.0
        %v656 = vmax.f32 %v497, 0.0
        %v657 = vmax.f32 %v516, 0.0
        %v658 = vmax.f32 %v535, 0.0
        %v659 = vmax.f32 %v554, 0.0
        %v660 = vmax.f32 %v573, 0.0
        %v661 = vmax.f32 %v592, 0.0
        %v662 = vmax.f32 %v611, 0.0
        %v663 = vmax.f32 %v630, 0.0
        %v664 = vpack.c.bf16 %v633, %v632
        %v665 = vpack.c.bf16 %v635, %v634
        %v666 = vpack.c.bf16 %v637, %v636
        %v667 = vpack.c.bf16 %v639, %v638
        %v668 = vpack.c.bf16 %v641, %v640
        %v669 = vpack.c.bf16 %v643, %v642
        %v670 = vpack.c.bf16 %v645, %v644
        %v671 = vpack.c.bf16 %v647, %v646
        %v672 = vpack.c.bf16 %v649, %v648
        %v673 = vpack.c.bf16 %v651, %v650
        %v674 = vpack.c.bf16 %v653, %v652
        %v675 = vpack.c.bf16 %v655, %v654
        %v676 = vpack.c.bf16 %v657, %v656
        %v677 = vpack.c.bf16 %v659, %v658
        %v678 = vpack.c.bf16 %v661, %v660
        %v679 = vpack.c.bf16 %v663, %v662
        %680 = vst [vmem:[%s238] sm:$0xff] %v664
        %681 = vst [vmem:[%s238 + $0x8] sm:$0xff] %v665
        %682 = vst [vmem:[%s238 + $0x10] sm:$0xff] %v666
        %683 = vst [vmem:[%s238 + $0x18] sm:$0xff] %v667
        %684 = vst [vmem:[%s238 + $0x20] sm:$0xff] %v668
        %685 = vst [vmem:[%s238 + $0x28] sm:$0xff] %v669
        %686 = vst [vmem:[%s238 + $0x30] sm:$0xff] %v670
        %687 = vst [vmem:[%s238 + $0x38] sm:$0xff] %v671
        %688 = vst [vmem:[%s238 + $0x40] sm:$0xff] %v672
        %689 = vst [vmem:[%s238 + $0x48] sm:$0xff] %v673
        %690 = vst [vmem:[%s238 + $0x50] sm:$0xff] %v674
        %691 = vst [vmem:[%s238 + $0x58] sm:$0xff] %v675
        %692 = vst [vmem:[%s238 + $0x60] sm:$0xff] %v676
        %693 = vst [vmem:[%s238 + $0x68] sm:$0xff] %v677
        %694 = vst [vmem:[%s238 + $0x70] sm:$0xff] %v678
        %695 = vst [vmem:[%s238 + $0x78] sm:$0xff] %v679
        %s696 = sand.u32 %s90, 1
        %s697 = sand.u32 %s90, 1
        %s698 = smul.addr %s697, 128
        %s699 = scalar_lea.vmem [#allocation3], %s698
        // Predicated region
        $region56: #{action_conv_attention_encoder.3} parent=50 // pred_check
          %p700 = pneg %p100
        $region57: #{action_conv_attention_encoder.3} parent=50 // pred_check_branch
          %702 = sbr.rel (%p700) target = $region59
        $region58: #{action_conv_attention_encoder.3} parent=50 // pred_region
          %s703 = smul.u32 8, %s14
          %s704 = smul.addr %s703, 4
          %s705 = scalar_lea.vmem %s3, %s704
          // Predicated region
          $region60: #{action_conv_attention_encoder.3} parent=58 // pred_check
            _
          $region61: #{action_conv_attention_encoder.3} parent=58 // pred_check_branch
            %707 = sbr.rel (0) target = $region63
          $region62: #{action_conv_attention_encoder.3} parent=58 // pred_region
            // Predicated region
            $region64: #{action_conv_attention_encoder.3} parent=62 // pred_check
              _
            $region65: #{action_conv_attention_encoder.3} parent=62 // pred_check_branch
              %709 = sbr.rel (0) target = $region67
            $region66: #{action_conv_attention_encoder.3} parent=62 // pred_region
              loop: start=0, step=1, limit=1
              $region68: #{action_conv_attention_encoder.3} parent=66 // loop_pre_header
                _
              $region69: #{action_conv_attention_encoder.3} parent=66 // loop_header
                %s711 = sphi 0, %s715
                %p712 = scmp.ge.s32.totalorder %s711, 1
                %s716 = sphi %s699, %s699
                %s717 = sphi %s705, %s705
              $region70: #{action_conv_attention_encoder.3} parent=66 // loop_header_branch
                %714 = sbr.rel (%p712) target = $region74
              $region71: #{action_conv_attention_encoder.3} parent=66 // loop_body
                %v718 = vld [vmem:[%s716] sm:$0xff]
                %719 = vst [vmem:[%s717] sm:$0xff] %v718
                %v720 = vld [vmem:[%s716 + $0x8] sm:$0xff]
                %721 = vst [vmem:[%s717 + $0x8] sm:$0xff] %v720
                %v722 = vld [vmem:[%s716 + $0x10] sm:$0xff]
                %723 = vst [vmem:[%s717 + $0x10] sm:$0xff] %v722
                %v724 = vld [vmem:[%s716 + $0x18] sm:$0xff]
                %725 = vst [vmem:[%s717 + $0x18] sm:$0xff] %v724
                %v726 = vld [vmem:[%s716 + $0x20] sm:$0xff]
                %727 = vst [vmem:[%s717 + $0x40] sm:$0xff] %v726
                %v728 = vld [vmem:[%s716 + $0x28] sm:$0xff]
                %729 = vst [vmem:[%s717 + $0x48] sm:$0xff] %v728
                %v730 = vld [vmem:[%s716 + $0x30] sm:$0xff]
                %731 = vst [vmem:[%s717 + $0x50] sm:$0xff] %v730
                %v732 = vld [vmem:[%s716 + $0x38] sm:$0xff]
                %733 = vst [vmem:[%s717 + $0x58] sm:$0xff] %v732
                %v734 = vld [vmem:[%s716 + $0x40] sm:$0xff]
                %735 = vst [vmem:[%s717 + $0x80] sm:$0xff] %v734
                %v736 = vld [vmem:[%s716 + $0x48] sm:$0xff]
                %737 = vst [vmem:[%s717 + $0x88] sm:$0xff] %v736
                %v738 = vld [vmem:[%s716 + $0x50] sm:$0xff]
                %739 = vst [vmem:[%s717 + $0x90] sm:$0xff] %v738
                %v740 = vld [vmem:[%s716 + $0x58] sm:$0xff]
                %741 = vst [vmem:[%s717 + $0x98] sm:$0xff] %v740
                %v742 = vld [vmem:[%s716 + $0x60] sm:$0xff]
                %743 = vst [vmem:[%s717 + $0xc0] sm:$0xff] %v742
                %v744 = vld [vmem:[%s716 + $0x68] sm:$0xff]
                %745 = vst [vmem:[%s717 + $0xc8] sm:$0xff] %v744
                %v746 = vld [vmem:[%s716 + $0x70] sm:$0xff]
                %747 = vst [vmem:[%s717 + $0xd0] sm:$0xff] %v746
                %v748 = vld [vmem:[%s716 + $0x78] sm:$0xff]
                %749 = vst [vmem:[%s717 + $0xd8] sm:$0xff] %v748
              $region72: #{action_conv_attention_encoder.3} parent=66 // loop_footer
                %s715 = sadd.s32 1, %s711
              $region73: #{action_conv_attention_encoder.3} parent=66 // loop_footer_branch
                %710 = sbr.rel target = $region69
              $region74: #{action_conv_attention_encoder.3} parent=66 // loop_exit
                _
            $region67: #{action_conv_attention_encoder.3} parent=62 // pred_fallthru
              _
            // Predicated region
            $region75: #{action_conv_attention_encoder.3} parent=62 // pred_check
              _
            $region76: #{action_conv_attention_encoder.3} parent=62 // pred_check_branch
              %751 = sbr.rel target = $region78
            $region77: #{action_conv_attention_encoder.3} parent=62 // pred_region
              _
            $region78: #{action_conv_attention_encoder.3} parent=62 // pred_fallthru
              _
          $region63: #{action_conv_attention_encoder.3} parent=58 // pred_fallthru
            _
          %752 = vnop
        $region59: #{action_conv_attention_encoder.3} parent=50 // pred_fallthru
          _
      $region51: #{action_conv_attention_encoder.3} parent=5 // pred_fallthru
        _
      %p753 = scmp.le.s32.totalorder 2, %s9
      // Predicated region
      $region79: #{action_conv_attention_encoder.3} parent=5 // pred_check
        %p754 = pneg %p753
      $region80: #{action_conv_attention_encoder.3} parent=5 // pred_check_branch
        %756 = sbr.rel (%p754) target = $region82
      $region81: #{action_conv_attention_encoder.3} parent=5 // pred_region
        %s757 = ssub.s32 %s9, 2
        // Predicated region
        $region83: #{action_conv_attention_encoder.3} parent=81 // pred_check
          %p758 = pneg %p106
        $region84: #{action_conv_attention_encoder.3} parent=81 // pred_check_branch
          %760 = sbr.rel (%p758) target = $region86
        $region85: #{action_conv_attention_encoder.3} parent=81 // pred_region
          %s761 = sand.u32 %s91, 1
          %s762 = sand.u32 %s91, 1
          %s763 = smul.addr %s762, 128
          %s764 = scalar_lea.vmem [#allocation3], %s763
        $region86: #{action_conv_attention_encoder.3} parent=81 // pred_fallthru
          _
      $region82: #{action_conv_attention_encoder.3} parent=5 // pred_fallthru
        _
    $region6: #{action_conv_attention_encoder.3} parent=1 // loop_footer
      %s13 = sadd.s32 1, %s9
    $region7: #{action_conv_attention_encoder.3} parent=1 // loop_footer_branch
      %8 = sbr.rel target = $region3
    $region8: #{action_conv_attention_encoder.3} parent=1 // loop_exit
      _

// kernel: action_conv_attention_encoder.4
$region0: #{action_conv_attention_encoder.4}
  #allocation0 [shape = 'u32[]', space=smem, size = 0x4, offset = 0x4, fixed_abs, tag = 'smem constant byte address 0x4 - core index']
  #allocation1 [shape = 'u32[72,128]{1,0:T(1,128)}', space=vmem, size = 0x9000, scoped, tag = 'internal scratch']
  %s0 = inlined_call_operand.vmem [shape: bf16[16,288], index: 0, kind: input, shape index: {}]
  %s1 = inlined_call_operand.vmem [shape: f32[16,1], index: 1, kind: input, shape index: {}]
  %s2 = inlined_call_operand.vmem [shape: bf16[288,450], index: 2, kind: input, shape index: {}]
  %s3 = inlined_call_operand.vmem [shape: bf16[16,450], index: 3, kind: output, shape index: {}]
  %s4 = sld [smem:[#allocation0]]
  $region22: #{action_conv_attention_encoder.4} parent=0
    _
  %s6 = ssub.s32 1, %s4
  %s7 = scalar_select 0, %s6, %s4
  // Predicated region
  $region2: #{action_conv_attention_encoder.4} parent=0 // pred_check
    _
  $region3: #{action_conv_attention_encoder.4} parent=0 // pred_check_branch
    %9 = sbr.rel (0) target = $region5
  $region4: #{action_conv_attention_encoder.4} parent=0 // pred_region
    _
  $region5: #{action_conv_attention_encoder.4} parent=0 // pred_fallthru
    _
  // Predicated region
  $region6: #{action_conv_attention_encoder.4} parent=0 // pred_check
    _
  $region7: #{action_conv_attention_encoder.4} parent=0 // pred_check_branch
    %11 = sbr.rel (0) target = $region9
  $region8: #{action_conv_attention_encoder.4} parent=0 // pred_region
    _
  $region9: #{action_conv_attention_encoder.4} parent=0 // pred_fallthru
    _
  // Predicated region
  $region10: #{action_conv_attention_encoder.4} parent=0 // pred_check
    _
  $region11: #{action_conv_attention_encoder.4} parent=0 // pred_check_branch
    %13 = sbr.rel (0) target = $region13
  $region12: #{action_conv_attention_encoder.4} parent=0 // pred_region
    _
  $region13: #{action_conv_attention_encoder.4} parent=0 // pred_fallthru
    _
  %v15 = vld [vmem:[%s0] sm:$0xff]
  %v16 = vld [vmem:[%s0 + $0x8] sm:$0xf]
  %v17 = vld [vmem:[%s0 + $0xc] sm:$0xff]
  %v18 = vld [vmem:[%s0 + $0x14] sm:$0xf]
  %v19 = vld [vmem:[%s2] sm:$0xff]
  %v20 = vld [vmem:[%s2 + $0x8] sm:$0xff]
  %v21 = vld [vmem:[%s2 + $0x10] sm:$0xff]
  %v22 = vld [vmem:[%s2 + $0x18] sm:$0xff]
  %v23 = vld [vmem:[%s2 + $0x20] sm:$0xff]
  %v24 = vld [vmem:[%s2 + $0x28] sm:$0xff]
  %v25 = vld [vmem:[%s2 + $0x30] sm:$0xff]
  %v26 = vld [vmem:[%s2 + $0x38] sm:$0xff]
  %v27 = vld [vmem:[%s2 + $0x40] sm:$0xff]
  %v28 = vld [vmem:[%s2 + $0x48] sm:$0xff]
  %v29 = vld [vmem:[%s2 + $0x50] sm:$0xff]
  %v30 = vld [vmem:[%s2 + $0x58] sm:$0xff]
  %v31 = vld [vmem:[%s2 + $0x60] sm:$0xff]
  %v32 = vld [vmem:[%s2 + $0x68] sm:$0xff]
  %v33 = vld [vmem:[%s2 + $0x70] sm:$0xff]
  %v34 = vld [vmem:[%s2 + $0x78] sm:$0xff]
  %v35 = vld [vmem:[%s2 + $0x80] sm:$0xff]
  %v36 = vld [vmem:[%s2 + $0x88] sm:$0xff]
  %v37 = vld [vmem:[%s2 + $0x90] sm:$0xff]
  %v38 = vld [vmem:[%s2 + $0x98] sm:$0xff]
  %v39 = vld [vmem:[%s2 + $0xa0] sm:$0xff]
  %v40 = vld [vmem:[%s2 + $0xa8] sm:$0xff]
  %v41 = vld [vmem:[%s2 + $0xb0] sm:$0xff]
  %v42 = vld [vmem:[%s2 + $0xb8] sm:$0xff]
  %v43 = vld [vmem:[%s2 + $0xc0] sm:$0xff]
  %v44 = vld [vmem:[%s2 + $0xc8] sm:$0xff]
  %v45 = vld [vmem:[%s2 + $0xd0] sm:$0xff]
  %v46 = vld [vmem:[%s2 + $0xd8] sm:$0xff]
  %v47 = vld [vmem:[%s2 + $0xe0] sm:$0xff]
  %v48 = vld [vmem:[%s2 + $0xe8] sm:$0xff]
  %v49 = vld [vmem:[%s2 + $0xf0] sm:$0xff]
  %v50 = vld [vmem:[%s2 + $0xf8] sm:$0xff]
  %v51 = vld [vmem:[%s2 + $0x100] sm:$0xff]
  %v52 = vld [vmem:[%s2 + $0x108] sm:$0xff]
  %v53 = vld [vmem:[%s2 + $0x110] sm:$0xff]
  %v54 = vld [vmem:[%s2 + $0x118] sm:$0xff]
  %v55 = vld [vmem:[%s2 + $0x120] sm:$0xff]
  %v56 = vld [vmem:[%s2 + $0x128] sm:$0xff]
  %v57 = vld [vmem:[%s2 + $0x130] sm:$0xff]
  %v58 = vld [vmem:[%s2 + $0x138] sm:$0xff]
  %v59 = vld [vmem:[%s2 + $0x140] sm:$0xff]
  %v60 = vld [vmem:[%s2 + $0x148] sm:$0xff]
  %v61 = vld [vmem:[%s2 + $0x150] sm:$0xff]
  %v62 = vld [vmem:[%s2 + $0x158] sm:$0xff]
  %v63 = vld [vmem:[%s2 + $0x160] sm:$0xff]
  %v64 = vld [vmem:[%s2 + $0x168] sm:$0xff]
  %v65 = vld [vmem:[%s2 + $0x170] sm:$0xff]
  %v66 = vld [vmem:[%s2 + $0x178] sm:$0xff]
  %v67 = vld [vmem:[%s2 + $0x180] sm:$0xff]
  %v68 = vld [vmem:[%s2 + $0x188] sm:$0xff]
  %v69 = vld [vmem:[%s2 + $0x190] sm:$0xff]
  %v70 = vld [vmem:[%s2 + $0x198] sm:$0xff]
  %v71 = vld [vmem:[%s2 + $0x1a0] sm:$0xff]
  %v72 = vld [vmem:[%s2 + $0x1a8] sm:$0xff]
  %v73 = vld [vmem:[%s2 + $0x1b0] sm:$0xff]
  %v74 = vld [vmem:[%s2 + $0x1b8] sm:$0xff]
  %v75 = vld [vmem:[%s2 + $0x1c0] sm:$0xff]
  %v76 = vld [vmem:[%s2 + $0x1c8] sm:$0xff]
  %v77 = vld [vmem:[%s2 + $0x1d0] sm:$0xff]
  %v78 = vld [vmem:[%s2 + $0x1d8] sm:$0xff]
  %v79 = vld [vmem:[%s2 + $0x1e0] sm:$0xff]
  %v80 = vld [vmem:[%s2 + $0x1e8] sm:$0xff]
  %v81 = vld [vmem:[%s2 + $0x1f0] sm:$0xff]
  %v82 = vld [vmem:[%s2 + $0x1f8] sm:$0xff]
  %v83 = vld [vmem:[%s2 + $0x200] sm:$0xff]
  %v84 = vld [vmem:[%s2 + $0x208] sm:$0xff]
  %v85 = vld [vmem:[%s2 + $0x210] sm:$0xff]
  %v86 = vld [vmem:[%s2 + $0x218] sm:$0xff]
  %v87 = vld [vmem:[%s2 + $0x220] sm:$0xff]
  %v88 = vld [vmem:[%s2 + $0x228] sm:$0xff]
  %v89 = vld [vmem:[%s2 + $0x230] sm:$0xff]
  %v90 = vld [vmem:[%s2 + $0x238] sm:$0xff]
  %v91 = vld [vmem:[%s1] sm:$0xff]
  %v92 = vld [vmem:[%s1 + $0x8] sm:$0xff]
  %94 = vset.pattern.permute.xlu0 0
  %95 = vperm.xlu0 %94, %v91
  %v96 = vpop.permute.xlu0 %95
  %99 = vset.pattern.permute.xlu0 0
  %100 = vperm.xlu0 %99, %v92
  %v101 = vpop.permute.xlu0 %100
  %v107 = vunpack.c.l.b16 %v15
  %v108 = vunpack.c.h.b16 %v15
  %v109 = vunpack.c.l.b16 %v16
  %v110 = vunpack.c.l.b16 %v17
  %v111 = vunpack.c.h.b16 %v17
  %v112 = vunpack.c.l.b16 %v18
  %v113 = vpack.c.b16 %v110, %v107
  %v114 = vpack.c.b16 %v111, %v108
  %v115 = vpack.c.b16 %v112, %v109
  %v190 = vunpack.c.l.b16 %v19
  %v191 = vunpack.c.h.b16 %v19
  %v192 = vunpack.c.l.b16 %v20
  %v193 = vunpack.c.h.b16 %v20
  %v194 = vunpack.c.l.b16 %v21
  %v195 = vunpack.c.h.b16 %v21
  %v196 = vunpack.c.l.b16 %v22
  %v197 = vunpack.c.h.b16 %v22
  %v198 = vunpack.c.l.b16 %v23
  %v199 = vunpack.c.h.b16 %v23
  %v200 = vunpack.c.l.b16 %v24
  %v201 = vunpack.c.h.b16 %v24
  %v202 = vunpack.c.l.b16 %v25
  %v203 = vunpack.c.h.b16 %v25
  %v204 = vunpack.c.l.b16 %v26
  %v205 = vunpack.c.h.b16 %v26
  %v206 = vunpack.c.l.b16 %v27
  %v207 = vunpack.c.h.b16 %v27
  %v208 = vunpack.c.l.b16 %v28
  %v209 = vunpack.c.h.b16 %v28
  %v210 = vunpack.c.l.b16 %v29
  %v211 = vunpack.c.h.b16 %v29
  %v212 = vunpack.c.l.b16 %v30
  %v213 = vunpack.c.h.b16 %v30
  %v214 = vunpack.c.l.b16 %v31
  %v215 = vunpack.c.h.b16 %v31
  %v216 = vunpack.c.l.b16 %v32
  %v217 = vunpack.c.h.b16 %v32
  %v218 = vunpack.c.l.b16 %v33
  %v219 = vunpack.c.h.b16 %v33
  %v220 = vunpack.c.l.b16 %v34
  %v221 = vunpack.c.h.b16 %v34
  %v222 = vunpack.c.l.b16 %v35
  %v223 = vunpack.c.h.b16 %v35
  %v224 = vunpack.c.l.b16 %v36
  %v225 = vunpack.c.h.b16 %v36
  %v226 = vunpack.c.l.b16 %v37
  %v227 = vunpack.c.h.b16 %v37
  %v228 = vunpack.c.l.b16 %v38
  %v229 = vunpack.c.h.b16 %v38
  %v230 = vunpack.c.l.b16 %v39
  %v231 = vunpack.c.h.b16 %v39
  %v232 = vunpack.c.l.b16 %v40
  %v233 = vunpack.c.h.b16 %v40
  %v234 = vunpack.c.l.b16 %v41
  %v235 = vunpack.c.h.b16 %v41
  %v236 = vunpack.c.l.b16 %v42
  %v237 = vunpack.c.h.b16 %v42
  %v238 = vunpack.c.l.b16 %v43
  %v239 = vunpack.c.h.b16 %v43
  %v240 = vunpack.c.l.b16 %v44
  %v241 = vunpack.c.h.b16 %v44
  %v242 = vunpack.c.l.b16 %v45
  %v243 = vunpack.c.h.b16 %v45
  %v244 = vunpack.c.l.b16 %v46
  %v245 = vunpack.c.h.b16 %v46
  %v246 = vunpack.c.l.b16 %v47
  %v247 = vunpack.c.h.b16 %v47
  %v248 = vunpack.c.l.b16 %v48
  %v249 = vunpack.c.h.b16 %v48
  %v250 = vunpack.c.l.b16 %v49
  %v251 = vunpack.c.h.b16 %v49
  %v252 = vunpack.c.l.b16 %v50
  %v253 = vunpack.c.h.b16 %v50
  %v254 = vunpack.c.l.b16 %v51
  %v255 = vunpack.c.h.b16 %v51
  %v256 = vunpack.c.l.b16 %v52
  %v257 = vunpack.c.h.b16 %v52
  %v258 = vunpack.c.l.b16 %v53
  %v259 = vunpack.c.h.b16 %v53
  %v260 = vunpack.c.l.b16 %v54
  %v261 = vunpack.c.h.b16 %v54
  %v262 = vunpack.c.l.b16 %v55
  %v263 = vunpack.c.h.b16 %v55
  %v264 = vunpack.c.l.b16 %v56
  %v265 = vunpack.c.h.b16 %v56
  %v266 = vunpack.c.l.b16 %v57
  %v267 = vunpack.c.h.b16 %v57
  %v268 = vunpack.c.l.b16 %v58
  %v269 = vunpack.c.h.b16 %v58
  %v270 = vunpack.c.l.b16 %v59
  %v271 = vunpack.c.h.b16 %v59
  %v272 = vunpack.c.l.b16 %v60
  %v273 = vunpack.c.h.b16 %v60
  %v274 = vunpack.c.l.b16 %v61
  %v275 = vunpack.c.h.b16 %v61
  %v276 = vunpack.c.l.b16 %v62
  %v277 = vunpack.c.h.b16 %v62
  %v278 = vunpack.c.l.b16 %v63
  %v279 = vunpack.c.h.b16 %v63
  %v280 = vunpack.c.l.b16 %v64
  %v281 = vunpack.c.h.b16 %v64
  %v282 = vunpack.c.l.b16 %v65
  %v283 = vunpack.c.h.b16 %v65
  %v284 = vunpack.c.l.b16 %v66
  %v285 = vunpack.c.h.b16 %v66
  %v286 = vunpack.c.l.b16 %v67
  %v287 = vunpack.c.h.b16 %v67
  %v288 = vunpack.c.l.b16 %v68
  %v289 = vunpack.c.h.b16 %v68
  %v290 = vunpack.c.l.b16 %v69
  %v291 = vunpack.c.h.b16 %v69
  %v292 = vunpack.c.l.b16 %v70
  %v293 = vunpack.c.h.b16 %v70
  %v294 = vunpack.c.l.b16 %v71
  %v295 = vunpack.c.h.b16 %v71
  %v296 = vunpack.c.l.b16 %v72
  %v297 = vunpack.c.h.b16 %v72
  %v298 = vunpack.c.l.b16 %v73
  %v299 = vunpack.c.h.b16 %v73
  %v300 = vunpack.c.l.b16 %v74
  %v301 = vunpack.c.h.b16 %v74
  %v302 = vunpack.c.l.b16 %v75
  %v303 = vunpack.c.h.b16 %v75
  %v304 = vunpack.c.l.b16 %v76
  %v305 = vunpack.c.h.b16 %v76
  %v306 = vunpack.c.l.b16 %v77
  %v307 = vunpack.c.h.b16 %v77
  %v308 = vunpack.c.l.b16 %v78
  %v309 = vunpack.c.h.b16 %v78
  %v310 = vunpack.c.l.b16 %v79
  %v311 = vunpack.c.h.b16 %v79
  %v312 = vunpack.c.l.b16 %v80
  %v313 = vunpack.c.h.b16 %v80
  %v314 = vunpack.c.l.b16 %v81
  %v315 = vunpack.c.h.b16 %v81
  %v316 = vunpack.c.l.b16 %v82
  %v317 = vunpack.c.h.b16 %v82
  %v318 = vunpack.c.l.b16 %v83
  %v319 = vunpack.c.h.b16 %v83
  %v320 = vunpack.c.l.b16 %v84
  %v321 = vunpack.c.h.b16 %v84
  %v322 = vunpack.c.l.b16 %v85
  %v323 = vunpack.c.h.b16 %v85
  %v324 = vunpack.c.l.b16 %v86
  %v325 = vunpack.c.h.b16 %v86
  %v326 = vunpack.c.l.b16 %v87
  %v327 = vunpack.c.h.b16 %v87
  %v328 = vunpack.c.l.b16 %v88
  %v329 = vunpack.c.h.b16 %v88
  %v330 = vunpack.c.l.b16 %v89
  %v331 = vunpack.c.h.b16 %v89
  %v332 = vunpack.c.l.b16 %v90
  %v333 = vunpack.c.h.b16 %v90
  %v334 = vpack.c.b16 %v194, %v190
  %v335 = vpack.c.b16 %v195, %v191
  %v336 = vpack.c.b16 %v196, %v192
  %v337 = vpack.c.b16 %v197, %v193
  %v338 = vpack.c.b16 %v202, %v198
  %v339 = vpack.c.b16 %v203, %v199
  %v340 = vpack.c.b16 %v204, %v200
  %v341 = vpack.c.b16 %v205, %v201
  %v342 = vpack.c.b16 %v210, %v206
  %v343 = vpack.c.b16 %v211, %v207
  %v344 = vpack.c.b16 %v212, %v208
  %v345 = vpack.c.b16 %v213, %v209
  %v346 = vpack.c.b16 %v218, %v214
  %v347 = vpack.c.b16 %v219, %v215
  %v348 = vpack.c.b16 %v220, %v216
  %v349 = vpack.c.b16 %v221, %v217
  %v350 = vpack.c.b16 %v226, %v222
  %v351 = vpack.c.b16 %v227, %v223
  %v352 = vpack.c.b16 %v228, %v224
  %v353 = vpack.c.b16 %v229, %v225
  %v354 = vpack.c.b16 %v234, %v230
  %v355 = vpack.c.b16 %v235, %v231
  %v356 = vpack.c.b16 %v236, %v232
  %v357 = vpack.c.b16 %v237, %v233
  %v358 = vpack.c.b16 %v242, %v238
  %v359 = vpack.c.b16 %v243, %v239
  %v360 = vpack.c.b16 %v244, %v240
  %v361 = vpack.c.b16 %v245, %v241
  %v362 = vpack.c.b16 %v250, %v246
  %v363 = vpack.c.b16 %v251, %v247
  %v364 = vpack.c.b16 %v252, %v248
  %v365 = vpack.c.b16 %v253, %v249
  %v366 = vpack.c.b16 %v258, %v254
  %v367 = vpack.c.b16 %v259, %v255
  %v368 = vpack.c.b16 %v260, %v256
  %v369 = vpack.c.b16 %v261, %v257
  %v370 = vpack.c.b16 %v266, %v262
  %v371 = vpack.c.b16 %v267, %v263
  %v372 = vpack.c.b16 %v268, %v264
  %v373 = vpack.c.b16 %v269, %v265
  %v374 = vpack.c.b16 %v274, %v270
  %v375 = vpack.c.b16 %v275, %v271
  %v376 = vpack.c.b16 %v276, %v272
  %v377 = vpack.c.b16 %v277, %v273
  %v378 = vpack.c.b16 %v282, %v278
  %v379 = vpack.c.b16 %v283, %v279
  %v380 = vpack.c.b16 %v284, %v280
  %v381 = vpack.c.b16 %v285, %v281
  %v382 = vpack.c.b16 %v290, %v286
  %v383 = vpack.c.b16 %v291, %v287
  %v384 = vpack.c.b16 %v292, %v288
  %v385 = vpack.c.b16 %v293, %v289
  %v386 = vpack.c.b16 %v298, %v294
  %v387 = vpack.c.b16 %v299, %v295
  %v388 = vpack.c.b16 %v300, %v296
  %v389 = vpack.c.b16 %v301, %v297
  %v390 = vpack.c.b16 %v306, %v302
  %v391 = vpack.c.b16 %v307, %v303
  %v392 = vpack.c.b16 %v308, %v304
  %v393 = vpack.c.b16 %v309, %v305
  %v394 = vpack.c.b16 %v314, %v310
  %v395 = vpack.c.b16 %v315, %v311
  %v396 = vpack.c.b16 %v316, %v312
  %v397 = vpack.c.b16 %v317, %v313
  %v398 = vpack.c.b16 %v322, %v318
  %v399 = vpack.c.b16 %v323, %v319
  %v400 = vpack.c.b16 %v324, %v320
  %v401 = vpack.c.b16 %v325, %v321
  %v402 = vpack.c.b16 %v330, %v326
  %v403 = vpack.c.b16 %v331, %v327
  %v404 = vpack.c.b16 %v332, %v328
  %v405 = vpack.c.b16 %v333, %v329
  %vm478 = vcmask 261120
  %v480 = vsel %vm478, %v115, 0
  %482 = vmatpush.bf16.msra.mxu0 %v362
  %483 = vmatpush.bf16.msra.mxu0 %v358
  %484 = vmatpush.bf16.msra.mxu0 %v354
  %485 = vmatpush.bf16.msra.mxu0 %v350
  %486 = vmatpush.bf16.msra.mxu0 %v346
  %487 = vmatpush.bf16.msra.mxu0 %v342
  %488 = vmatpush.bf16.msra.mxu0 %v338
  %489 = vmatpush.bf16.msra.mxu0 %v334
  %490 = vmatmul.bf16.gmra.mxu0 %v113
  %v491 = vpop.f32.mrf.mxu0
  %v492 = vadd.f32 %v96, %v491
  %v493 = vpop.f32.mrf.mxu0
  %v494 = vadd.f32 %v101, %v493
  %495 = vdwg.mxu0
  %496 = vmatpush.bf16.msra.mxu0 %v394
  %497 = vmatpush.bf16.msra.mxu0 %v390
  %498 = vmatpush.bf16.msra.mxu0 %v386
  %499 = vmatpush.bf16.msra.mxu0 %v382
  %500 = vmatpush.bf16.msra.mxu0 %v378
  %501 = vmatpush.bf16.msra.mxu0 %v374
  %502 = vmatpush.bf16.msra.mxu0 %v370
  %503 = vmatpush.bf16.msra.mxu0 %v366
  %504 = vmatmul.bf16.gmra.mxu0 %v114
  %v505 = vpop.f32.mrf.mxu0
  %v506 = vadd.f32 %v492, %v505
  %v507 = vpop.f32.mrf.mxu0
  %v508 = vadd.f32 %v494, %v507
  %509 = vdwg.mxu0
  %510 = vmatpush.bf16.msra.mxu0 0
  %511 = vmatpush.bf16.msra.mxu0 0
  %512 = vmatpush.bf16.msra.mxu0 0
  %513 = vmatpush.bf16.msra.mxu0 0
  %514 = vmatpush.bf16.msra.mxu0 0
  %515 = vmatpush.bf16.msra.mxu0 0
  %516 = vmatpush.bf16.msra.mxu0 %v402
  %517 = vmatpush.bf16.msra.mxu0 %v398
  %518 = vmatmul.bf16.gmra.mxu0 %v480
  %v519 = vpop.f32.mrf.mxu0
  %v520 = vadd.f32 %v506, %v519
  %v521 = vpop.f32.mrf.mxu0
  %v522 = vadd.f32 %v508, %v521
  %523 = vdwg.mxu0
  %524 = vmatpush.bf16.msra.mxu0 %v363
  %525 = vmatpush.bf16.msra.mxu0 %v359
  %526 = vmatpush.bf16.msra.mxu0 %v355
  %527 = vmatpush.bf16.msra.mxu0 %v351
  %528 = vmatpush.bf16.msra.mxu0 %v347
  %529 = vmatpush.bf16.msra.mxu0 %v343
  %530 = vmatpush.bf16.msra.mxu0 %v339
  %531 = vmatpush.bf16.msra.mxu0 %v335
  %532 = vmatmul.bf16.gmra.mxu0 %v113
  %v533 = vpop.f32.mrf.mxu0
  %v534 = vadd.f32 %v96, %v533
  %v535 = vpop.f32.mrf.mxu0
  %v536 = vadd.f32 %v101, %v535
  %537 = vdwg.mxu0
  %538 = vmatpush.bf16.msra.mxu0 %v395
  %539 = vmatpush.bf16.msra.mxu0 %v391
  %540 = vmatpush.bf16.msra.mxu0 %v387
  %541 = vmatpush.bf16.msra.mxu0 %v383
  %542 = vmatpush.bf16.msra.mxu0 %v379
  %543 = vmatpush.bf16.msra.mxu0 %v375
  %544 = vmatpush.bf16.msra.mxu0 %v371
  %545 = vmatpush.bf16.msra.mxu0 %v367
  %546 = vmatmul.bf16.gmra.mxu0 %v114
  %v547 = vpop.f32.mrf.mxu0
  %v548 = vadd.f32 %v534, %v547
  %v549 = vpop.f32.mrf.mxu0
  %v550 = vadd.f32 %v536, %v549
  %551 = vdwg.mxu0
  %552 = vmatpush.bf16.msra.mxu0 0
  %553 = vmatpush.bf16.msra.mxu0 0
  %554 = vmatpush.bf16.msra.mxu0 0
  %555 = vmatpush.bf16.msra.mxu0 0
  %556 = vmatpush.bf16.msra.mxu0 0
  %557 = vmatpush.bf16.msra.mxu0 0
  %558 = vmatpush.bf16.msra.mxu0 %v403
  %559 = vmatpush.bf16.msra.mxu0 %v399
  %560 = vmatmul.bf16.gmra.mxu0 %v480
  %v561 = vpop.f32.mrf.mxu0
  %v562 = vadd.f32 %v548, %v561
  %v563 = vpop.f32.mrf.mxu0
  %v564 = vadd.f32 %v550, %v563
  %565 = vdwg.mxu0
  %566 = vmatpush.bf16.msra.mxu0 %v364
  %567 = vmatpush.bf16.msra.mxu0 %v360
  %568 = vmatpush.bf16.msra.mxu0 %v356
  %569 = vmatpush.bf16.msra.mxu0 %v352
  %570 = vmatpush.bf16.msra.mxu0 %v348
  %571 = vmatpush.bf16.msra.mxu0 %v344
  %572 = vmatpush.bf16.msra.mxu0 %v340
  %573 = vmatpush.bf16.msra.mxu0 %v336
  %574 = vmatmul.bf16.gmra.mxu0 %v113
  %v575 = vpop.f32.mrf.mxu0
  %v576 = vadd.f32 %v96, %v575
  %v577 = vpop.f32.mrf.mxu0
  %v578 = vadd.f32 %v101, %v577
  %579 = vdwg.mxu0
  %580 = vmatpush.bf16.msra.mxu0 %v396
  %581 = vmatpush.bf16.msra.mxu0 %v392
  %582 = vmatpush.bf16.msra.mxu0 %v388
  %583 = vmatpush.bf16.msra.mxu0 %v384
  %584 = vmatpush.bf16.msra.mxu0 %v380
  %585 = vmatpush.bf16.msra.mxu0 %v376
  %586 = vmatpush.bf16.msra.mxu0 %v372
  %587 = vmatpush.bf16.msra.mxu0 %v368
  %588 = vmatmul.bf16.gmra.mxu0 %v114
  %v589 = vpop.f32.mrf.mxu0
  %v590 = vadd.f32 %v576, %v589
  %v591 = vpop.f32.mrf.mxu0
  %v592 = vadd.f32 %v578, %v591
  %593 = vdwg.mxu0
  %594 = vmatpush.bf16.msra.mxu0 0
  %595 = vmatpush.bf16.msra.mxu0 0
  %596 = vmatpush.bf16.msra.mxu0 0
  %597 = vmatpush.bf16.msra.mxu0 0
  %598 = vmatpush.bf16.msra.mxu0 0
  %599 = vmatpush.bf16.msra.mxu0 0
  %600 = vmatpush.bf16.msra.mxu0 %v404
  %601 = vmatpush.bf16.msra.mxu0 %v400
  %602 = vmatmul.bf16.gmra.mxu0 %v480
  %v603 = vpop.f32.mrf.mxu0
  %v604 = vadd.f32 %v590, %v603
  %v605 = vpop.f32.mrf.mxu0
  %v606 = vadd.f32 %v592, %v605
  %607 = vdwg.mxu0
  %608 = vmatpush.bf16.msra.mxu0 %v365
  %609 = vmatpush.bf16.msra.mxu0 %v361
  %610 = vmatpush.bf16.msra.mxu0 %v357
  %611 = vmatpush.bf16.msra.mxu0 %v353
  %612 = vmatpush.bf16.msra.mxu0 %v349
  %613 = vmatpush.bf16.msra.mxu0 %v345
  %614 = vmatpush.bf16.msra.mxu0 %v341
  %615 = vmatpush.bf16.msra.mxu0 %v337
  %616 = vmatmul.bf16.gmra.mxu0 %v113
  %v617 = vpop.f32.mrf.mxu0
  %v618 = vadd.f32 %v96, %v617
  %v619 = vpop.f32.mrf.mxu0
  %v620 = vadd.f32 %v101, %v619
  %621 = vdwg.mxu0
  %622 = vmatpush.bf16.msra.mxu0 %v397
  %623 = vmatpush.bf16.msra.mxu0 %v393
  %624 = vmatpush.bf16.msra.mxu0 %v389
  %625 = vmatpush.bf16.msra.mxu0 %v385
  %626 = vmatpush.bf16.msra.mxu0 %v381
  %627 = vmatpush.bf16.msra.mxu0 %v377
  %628 = vmatpush.bf16.msra.mxu0 %v373
  %629 = vmatpush.bf16.msra.mxu0 %v369
  %630 = vmatmul.bf16.gmra.mxu0 %v114
  %v631 = vpop.f32.mrf.mxu0
  %v632 = vadd.f32 %v618, %v631
  %v633 = vpop.f32.mrf.mxu0
  %v634 = vadd.f32 %v620, %v633
  %635 = vdwg.mxu0
  %636 = vmatpush.bf16.msra.mxu0 0
  %637 = vmatpush.bf16.msra.mxu0 0
  %638 = vmatpush.bf16.msra.mxu0 0
  %639 = vmatpush.bf16.msra.mxu0 0
  %640 = vmatpush.bf16.msra.mxu0 0
  %641 = vmatpush.bf16.msra.mxu0 0
  %642 = vmatpush.bf16.msra.mxu0 %v405
  %643 = vmatpush.bf16.msra.mxu0 %v401
  %644 = vmatmul.bf16.gmra.mxu0 %v480
  %v645 = vpop.f32.mrf.mxu0
  %v646 = vadd.f32 %v632, %v645
  %v647 = vpop.f32.mrf.mxu0
  %v648 = vadd.f32 %v634, %v647
  %649 = vdwg.mxu0
  %v650 = vmax.f32 %v520, 0.0
  %v651 = vmax.f32 %v562, 0.0
  %v652 = vmax.f32 %v604, 0.0
  %v653 = vmax.f32 %v646, 0.0
  %v654 = vmax.f32 %v522, 0.0
  %v655 = vmax.f32 %v564, 0.0
  %v656 = vmax.f32 %v606, 0.0
  %v657 = vmax.f32 %v648, 0.0
  %v658 = vpack.c.bf16 %v651, %v650
  %v659 = vpack.c.bf16 %v653, %v652
  %v660 = vpack.c.bf16 %v655, %v654
  %v661 = vpack.c.bf16 %v657, %v656
  %662 = vst [vmem:[%s3] sm:$0xff] %v658
  %vm663 = vcmask 1043456
  %vm664 = vcmask 539652
  %vm665 = vmor %vm664, %vm663
  %666 = vst.msk [vmem:[%s3 + $0x8] sm:$0xff] %vm665, %v659
  %667 = vst [vmem:[%s3 + $0x10] sm:$0xff] %v660
  %668 = vst.msk [vmem:[%s3 + $0x18] sm:$0xff] %vm665, %v661
  // Predicated region
  $region14: #{action_conv_attention_encoder.4} parent=0 // pred_check
    _
  $region15: #{action_conv_attention_encoder.4} parent=0 // pred_check_branch
    %670 = sbr.rel (0) target = $region17
  $region16: #{action_conv_attention_encoder.4} parent=0 // pred_region
    _
  $region17: #{action_conv_attention_encoder.4} parent=0 // pred_fallthru
    _
  // Predicated region
  $region18: #{action_conv_attention_encoder.4} parent=0 // pred_check
    _
  $region19: #{action_conv_attention_encoder.4} parent=0 // pred_check_branch
    %672 = sbr.rel (0) target = $region21
  $region20: #{action_conv_attention_encoder.4} parent=0 // pred_region
    _
  $region21: #{action_conv_attention_encoder.4} parent=0 // pred_fallthru
    _

// kernel: action_conv_attention_encoder.5
$region0: #{action_conv_attention_encoder.5}
  #allocation0 [shape = 'u32[]', space=smem, size = 0x4, offset = 0x4, fixed_abs, tag = 'smem constant byte address 0x4 - core index']
  #allocation1 [shape = 'u32[72,128]{1,0:T(1,128)}', space=vmem, size = 0x9000, scoped, tag = 'internal scratch']
  %s0 = inlined_call_operand.vmem [shape: bf16[16,144], index: 0, kind: input, shape index: {}]
  %s1 = inlined_call_operand.vmem [shape: f32[16,1], index: 1, kind: input, shape index: {}]
  %s2 = inlined_call_operand.vmem [shape: bf16[144,98], index: 2, kind: input, shape index: {}]
  %s3 = inlined_call_operand.vmem [shape: f32[8,16,98], index: 3, kind: input, shape index: {}]
  %s4 = inlined_call_operand.vmem [shape: f32[98,2], index: 4, kind: input, shape index: {}]
  %s5 = inlined_call_operand.vmem [shape: f32[8,1], index: 5, kind: input, shape index: {}]
  %s6 = inlined_call_operand.vmem [shape: f32[8,2], index: 6, kind: output, shape index: {}]
  %s7 = sld [smem:[#allocation0]]
  $region34: #{action_conv_attention_encoder.5} parent=0
    _
  %s9 = ssub.s32 1, %s7
  %s10 = scalar_select 0, %s9, %s7
  // Predicated region
  $region2: #{action_conv_attention_encoder.5} parent=0 // pred_check
    _
  $region3: #{action_conv_attention_encoder.5} parent=0 // pred_check_branch
    %12 = sbr.rel (0) target = $region5
  $region4: #{action_conv_attention_encoder.5} parent=0 // pred_region
    _
  $region5: #{action_conv_attention_encoder.5} parent=0 // pred_fallthru
    _
  // Predicated region
  $region6: #{action_conv_attention_encoder.5} parent=0 // pred_check
    _
  $region7: #{action_conv_attention_encoder.5} parent=0 // pred_check_branch
    %14 = sbr.rel (0) target = $region9
  $region8: #{action_conv_attention_encoder.5} parent=0 // pred_region
    _
  $region9: #{action_conv_attention_encoder.5} parent=0 // pred_fallthru
    _
  // Predicated region
  $region10: #{action_conv_attention_encoder.5} parent=0 // pred_check
    _
  $region11: #{action_conv_attention_encoder.5} parent=0 // pred_check_branch
    %16 = sbr.rel (0) target = $region13
  $region12: #{action_conv_attention_encoder.5} parent=0 // pred_region
    _
  $region13: #{action_conv_attention_encoder.5} parent=0 // pred_fallthru
    _
  // Predicated region
  $region14: #{action_conv_attention_encoder.5} parent=0 // pred_check
    _
  $region15: #{action_conv_attention_encoder.5} parent=0 // pred_check_branch
    %18 = sbr.rel (0) target = $region17
  $region16: #{action_conv_attention_encoder.5} parent=0 // pred_region
    _
  $region17: #{action_conv_attention_encoder.5} parent=0 // pred_fallthru
    _
  // Predicated region
  $region18: #{action_conv_attention_encoder.5} parent=0 // pred_check
    _
  $region19: #{action_conv_attention_encoder.5} parent=0 // pred_check_branch
    %20 = sbr.rel (0) target = $region21
  $region20: #{action_conv_attention_encoder.5} parent=0 // pred_region
    _
  $region21: #{action_conv_attention_encoder.5} parent=0 // pred_fallthru
    _
  // Predicated region
  $region22: #{action_conv_attention_encoder.5} parent=0 // pred_check
    _
  $region23: #{action_conv_attention_encoder.5} parent=0 // pred_check_branch
    %22 = sbr.rel (0) target = $region25
  $region24: #{action_conv_attention_encoder.5} parent=0 // pred_region
    _
  $region25: #{action_conv_attention_encoder.5} parent=0 // pred_fallthru
    _
  %v24 = vld [vmem:[%s0] sm:$0xff]
  %v25 = vld [vmem:[%s0 + $0x8] sm:$0xff]
  %v26 = vld [vmem:[%s2] sm:$0xf]
  %v27 = vld [vmem:[%s2 + $0x4] sm:$0xf]
  %v28 = vld [vmem:[%s2 + $0x8] sm:$0xf]
  %v29 = vld [vmem:[%s2 + $0xc] sm:$0xf]
  %v30 = vld [vmem:[%s2 + $0x10] sm:$0xf]
  %v31 = vld [vmem:[%s2 + $0x14] sm:$0xf]
  %v32 = vld [vmem:[%s2 + $0x18] sm:$0xf]
  %v33 = vld [vmem:[%s2 + $0x1c] sm:$0xf]
  %v34 = vld [vmem:[%s2 + $0x20] sm:$0xf]
  %v35 = vld [vmem:[%s2 + $0x24] sm:$0xf]
  %v36 = vld [vmem:[%s2 + $0x28] sm:$0xf]
  %v37 = vld [vmem:[%s2 + $0x2c] sm:$0xf]
  %v38 = vld [vmem:[%s2 + $0x30] sm:$0xf]
  %v39 = vld [vmem:[%s2 + $0x34] sm:$0xf]
  %v40 = vld [vmem:[%s2 + $0x38] sm:$0xf]
  %v41 = vld [vmem:[%s2 + $0x3c] sm:$0xf]
  %v42 = vld [vmem:[%s2 + $0x40] sm:$0xf]
  %v43 = vld [vmem:[%s2 + $0x44] sm:$0xf]
  %v44 = vld [vmem:[%s1] sm:$0xff]
  %v45 = vld [vmem:[%s1 + $0x8] sm:$0xff]
  %47 = vset.pattern.permute.xlu0 0
  %48 = vperm.xlu0 %47, %v44
  %v49 = vpop.permute.xlu0 %48
  %52 = vset.pattern.permute.xlu0 0
  %53 = vperm.xlu0 %52, %v45
  %v54 = vpop.permute.xlu0 %53
  %v58 = vunpack.c.l.b16 %v24
  %v59 = vunpack.c.h.b16 %v24
  %v60 = vunpack.c.l.b16 %v25
  %v61 = vunpack.c.h.b16 %v25
  %v62 = vpack.c.b16 %v60, %v58
  %v63 = vpack.c.b16 %v61, %v59
  %v83 = vunpack.c.l.b16 %v26
  %v84 = vunpack.c.l.b16 %v27
  %v85 = vunpack.c.l.b16 %v28
  %v86 = vunpack.c.l.b16 %v29
  %v87 = vunpack.c.l.b16 %v30
  %v88 = vunpack.c.l.b16 %v31
  %v89 = vunpack.c.l.b16 %v32
  %v90 = vunpack.c.l.b16 %v33
  %v91 = vunpack.c.l.b16 %v34
  %v92 = vunpack.c.l.b16 %v35
  %v93 = vunpack.c.l.b16 %v36
  %v94 = vunpack.c.l.b16 %v37
  %v95 = vunpack.c.l.b16 %v38
  %v96 = vunpack.c.l.b16 %v39
  %v97 = vunpack.c.l.b16 %v40
  %v98 = vunpack.c.l.b16 %v41
  %v99 = vunpack.c.l.b16 %v42
  %v100 = vunpack.c.l.b16 %v43
  %v101 = vpack.c.b16 %v84, %v83
  %v102 = vpack.c.b16 %v86, %v85
  %v103 = vpack.c.b16 %v88, %v87
  %v104 = vpack.c.b16 %v90, %v89
  %v105 = vpack.c.b16 %v92, %v91
  %v106 = vpack.c.b16 %v94, %v93
  %v107 = vpack.c.b16 %v96, %v95
  %v108 = vpack.c.b16 %v98, %v97
  %v109 = vpack.c.b16 %v100, %v99
  %vm119 = vcmask 130048
  %v121 = vsel %vm119, %v63, 0
  %123 = vmatpush.bf16.msra.mxu0 %v108
  %124 = vmatpush.bf16.msra.mxu0 %v107
  %125 = vmatpush.bf16.msra.mxu0 %v106
  %126 = vmatpush.bf16.msra.mxu0 %v105
  %127 = vmatpush.bf16.msra.mxu0 %v104
  %128 = vmatpush.bf16.msra.mxu0 %v103
  %129 = vmatpush.bf16.msra.mxu0 %v102
  %130 = vmatpush.bf16.msra.mxu0 %v101
  %131 = vmatmul.bf16.gmra.mxu0 %v62
  %v132 = vpop.f32.mrf.mxu0
  %v133 = vadd.f32 %v49, %v132
  %v134 = vpop.f32.mrf.mxu0
  %v135 = vadd.f32 %v54, %v134
  %136 = vdwg.mxu0
  %137 = vmatpush.bf16.msra.mxu0 0
  %138 = vmatpush.bf16.msra.mxu0 0
  %139 = vmatpush.bf16.msra.mxu0 0
  %140 = vmatpush.bf16.msra.mxu0 0
  %141 = vmatpush.bf16.msra.mxu0 0
  %142 = vmatpush.bf16.msra.mxu0 0
  %143 = vmatpush.bf16.msra.mxu0 0
  %144 = vmatpush.bf16.msra.mxu0 %v109
  %145 = vmatmul.bf16.gmra.mxu0 %v121
  %v146 = vpop.f32.mrf.mxu0
  %v147 = vadd.f32 %v133, %v146
  %v148 = vpop.f32.mrf.mxu0
  %v149 = vadd.f32 %v135, %v148
  %150 = vdwg.mxu0
  %v151 = vmax.f32 %v147, 0.0
  %v152 = vmax.f32 %v149, 0.0
  %v153 = vld [vmem:[%s3] sm:$0xff]
  %v154 = vld [vmem:[%s3 + $0x8] sm:$0xff]
  %v155 = vmul.f32 %v153, %v151
  %v156 = vmul.f32 %v154, %v152
  %vm157 = vcmask 801792
  %v158 = vsel %vm157, %v155, 0.0
  %v159 = vsel %vm157, %v156, 0.0
  %v160 = vadd.f32 %v158, %v159
  %v161 = vrot.slane %v160, 4
  %v162 = vadd.f32 %v160, %v161
  %v163 = vrot.slane %v162, 2
  %v164 = vadd.f32 %v162, %v163
  %v165 = vrot.slane %v164, 1
  %v166 = vadd.f32 %v164, %v165
  %s167 = scalar_lea.vmem %s3, 16
  %v168 = vld [vmem:[%s167] sm:$0xff]
  %v169 = vld [vmem:[%s167 + $0x8] sm:$0xff]
  %v170 = vmul.f32 %v168, %v151
  %v171 = vmul.f32 %v169, %v152
  %v172 = vsel %vm157, %v170, 0.0
  %v173 = vsel %vm157, %v171, 0.0
  %v174 = vadd.f32 %v172, %v173
  %v175 = vrot.slane %v174, 4
  %v176 = vadd.f32 %v174, %v175
  %v177 = vrot.slane %v176, 2
  %v178 = vadd.f32 %v176, %v177
  %v179 = vrot.slane %v178, 1
  %v180 = vadd.f32 %v178, %v179
  %s181 = scalar_lea.vmem %s3, 32
  %v182 = vld [vmem:[%s181] sm:$0xff]
  %v183 = vld [vmem:[%s181 + $0x8] sm:$0xff]
  %v184 = vmul.f32 %v182, %v151
  %v185 = vmul.f32 %v183, %v152
  %v186 = vsel %vm157, %v184, 0.0
  %v187 = vsel %vm157, %v185, 0.0
  %v188 = vadd.f32 %v186, %v187
  %v189 = vrot.slane %v188, 4
  %v190 = vadd.f32 %v188, %v189
  %v191 = vrot.slane %v190, 2
  %v192 = vadd.f32 %v190, %v191
  %v193 = vrot.slane %v192, 1
  %v194 = vadd.f32 %v192, %v193
  %s195 = scalar_lea.vmem %s3, 48
  %v196 = vld [vmem:[%s195] sm:$0xff]
  %v197 = vld [vmem:[%s195 + $0x8] sm:$0xff]
  %v198 = vmul.f32 %v196, %v151
  %v199 = vmul.f32 %v197, %v152
  %v200 = vsel %vm157, %v198, 0.0
  %v201 = vsel %vm157, %v199, 0.0
  %v202 = vadd.f32 %v200, %v201
  %v203 = vrot.slane %v202, 4
  %v204 = vadd.f32 %v202, %v203
  %v205 = vrot.slane %v204, 2
  %v206 = vadd.f32 %v204, %v205
  %v207 = vrot.slane %v206, 1
  %v208 = vadd.f32 %v206, %v207
  %s209 = scalar_lea.vmem %s3, 64
  %v210 = vld [vmem:[%s209] sm:$0xff]
  %v211 = vld [vmem:[%s209 + $0x8] sm:$0xff]
  %v212 = vmul.f32 %v210, %v151
  %v213 = vmul.f32 %v211, %v152
  %v214 = vsel %vm157, %v212, 0.0
  %v215 = vsel %vm157, %v213, 0.0
  %v216 = vadd.f32 %v214, %v215
  %v217 = vrot.slane %v216, 4
  %v218 = vadd.f32 %v216, %v217
  %v219 = vrot.slane %v218, 2
  %v220 = vadd.f32 %v218, %v219
  %v221 = vrot.slane %v220, 1
  %v222 = vadd.f32 %v220, %v221
  %s223 = scalar_lea.vmem %s3, 80
  %v224 = vld [vmem:[%s223] sm:$0xff]
  %v225 = vld [vmem:[%s223 + $0x8] sm:$0xff]
  %v226 = vmul.f32 %v224, %v151
  %v227 = vmul.f32 %v225, %v152
  %v228 = vsel %vm157, %v226, 0.0
  %v229 = vsel %vm157, %v227, 0.0
  %v230 = vadd.f32 %v228, %v229
  %v231 = vrot.slane %v230, 4
  %v232 = vadd.f32 %v230, %v231
  %v233 = vrot.slane %v232, 2
  %v234 = vadd.f32 %v232, %v233
  %v235 = vrot.slane %v234, 1
  %v236 = vadd.f32 %v234, %v235
  %s237 = scalar_lea.vmem %s3, 96
  %v238 = vld [vmem:[%s237] sm:$0xff]
  %v239 = vld [vmem:[%s237 + $0x8] sm:$0xff]
  %v240 = vmul.f32 %v238, %v151
  %v241 = vmul.f32 %v239, %v152
  %v242 = vsel %vm157, %v240, 0.0
  %v243 = vsel %vm157, %v241, 0.0
  %v244 = vadd.f32 %v242, %v243
  %v245 = vrot.slane %v244, 4
  %v246 = vadd.f32 %v244, %v245
  %v247 = vrot.slane %v246, 2
  %v248 = vadd.f32 %v246, %v247
  %v249 = vrot.slane %v248, 1
  %v250 = vadd.f32 %v248, %v249
  %s251 = scalar_lea.vmem %s3, 112
  %v252 = vld [vmem:[%s251] sm:$0xff]
  %v253 = vld [vmem:[%s251 + $0x8] sm:$0xff]
  %v254 = vmul.f32 %v252, %v151
  %v255 = vmul.f32 %v253, %v152
  %v256 = vsel %vm157, %v254, 0.0
  %v257 = vsel %vm157, %v255, 0.0
  %v258 = vadd.f32 %v256, %v257
  %v259 = vrot.slane %v258, 4
  %v260 = vadd.f32 %v258, %v259
  %v261 = vrot.slane %v260, 2
  %v262 = vadd.f32 %v260, %v261
  %v263 = vrot.slane %v262, 1
  %v264 = vadd.f32 %v262, %v263
  %vm265 = vcmask 1040384
  %v266 = vsel %vm265, %v166, %v180
  %vm267 = vcmask 1041408
  %v268 = vsel %vm267, %v266, %v194
  %vm269 = vcmask 1042432
  %v270 = vsel %vm269, %v268, %v208
  %vm271 = vcmask 1043456
  %v272 = vsel %vm271, %v270, %v222
  %vm273 = vcmask 1044480
  %v274 = vsel %vm273, %v272, %v236
  %vm275 = vcmask 1045504
  %v276 = vsel %vm275, %v274, %v250
  %vm277 = vcmask 1046528
  %v278 = vsel %vm277, %v276, %v264
  %v279 = vld [vmem:[%s4] sm:$0xff]
  %v280 = vld [vmem:[%s4 + $0x8] sm:$0xff]
  %v281 = vld [vmem:[%s4 + $0x10] sm:$0xff]
  %v282 = vld [vmem:[%s4 + $0x18] sm:$0xff]
  %v283 = vld [vmem:[%s4 + $0x20] sm:$0xff]
  %v284 = vld [vmem:[%s4 + $0x28] sm:$0xff]
  %v285 = vld [vmem:[%s4 + $0x30] sm:$0xff]
  %v286 = vld [vmem:[%s4 + $0x38] sm:$0xff]
  %v287 = vld [vmem:[%s4 + $0x40] sm:$0xff]
  %v288 = vld [vmem:[%s4 + $0x48] sm:$0xff]
  %v289 = vld [vmem:[%s4 + $0x50] sm:$0xff]
  %v290 = vld [vmem:[%s4 + $0x58] sm:$0xff]
  %v291 = vld [vmem:[%s4 + $0x60] sm:$0x3]
  %v292 = vld [vmem:[%s5] sm:$0xff]
  %294 = vset.pattern.permute.xlu0 0
  %295 = vperm.xlu0 %294, %v292
  %v296 = vpop.permute.xlu0 %295
  %v299 = vsel %vm157, %v278, 0
  %v302 = vsel %vm267, %v291, 0
  %304 = vmatpush.msra.mxu0 0.0
  %305 = vmatpush.msra.mxu0 0.0
  %306 = vmatpush.msra.mxu0 0.0
  %307 = vmatpush.msra.mxu0 %v302
  %308 = vmatpush.msra.mxu0 %v290
  %309 = vmatpush.msra.mxu0 %v289
  %310 = vmatpush.msra.mxu0 %v288
  %311 = vmatpush.msra.mxu0 %v287
  %312 = vmatpush.msra.mxu0 %v286
  %313 = vmatpush.msra.mxu0 %v285
  %314 = vmatpush.msra.mxu0 %v284
  %315 = vmatpush.msra.mxu0 %v283
  %316 = vmatpush.msra.mxu0 %v282
  %317 = vmatpush.msra.mxu0 %v281
  %318 = vmatpush.msra.mxu0 %v280
  %319 = vmatpush.msra.mxu0 %v279
  %320 = vmatmul.f32.gmra.mxu0 %v299
  %v321 = vpop.f32.mrf.mxu0
  %v322 = vadd.f32 %v296, %v321
  %323 = vdwg.mxu0
  %v324 = vand.u32 2147483647, %v322
  %vm325 = vcmask 15360
  %v326 = vsel %vm325, %v324, -inf
  %v327 = vrot.slane %v326, 4
  %v328 = vmax.f32 %v326, %v327
  %v329 = vrot.slane %v328, 2
  %v330 = vmax.f32 %v328, %v329
  %v331 = vrot.slane %v330, 1
  %v332 = vmax.f32 %v330, %v331
  %v333 = vsub.f32 %v324, %v332
  %v334 = vmul.f32 %v333, 1.442695
  %v335 = vpow.pop %v334
  %v336 = vsel %vm325, %v335, 0.0
  %v337 = vrot.slane %v336, 4
  %v338 = vadd.f32 %v336, %v337
  %v339 = vrot.slane %v338, 2
  %v340 = vadd.f32 %v338, %v339
  %v341 = vrot.slane %v340, 1
  %v342 = vadd.f32 %v340, %v341
  %v343 = vrcp.pop %v342
  %v344 = vmul.f32 %v342, %v343
  %v345 = vsub.f32 1.0, %v344
  %v346 = vmul.f32 %v343, %v345
  %v347 = vadd.f32 %v343, %v346
  %vm348 = vweird.f32 %v342
  %vm349 = vweird.f32 %v343
  %vm350 = vmor %vm348, %vm349
  %v351 = vsel %vm350, %v343, %v347
  %v352 = vand.u32 2147483647, %v342
  %vm353 = vcmp.eq.f32.partialorder %v352, 8.507059e+37
  %v354 = vand.u32 %v342, 2147483648
  %v355 = vor.u32 1.1754944e-38, %v354
  %v356 = vsel %vm353, %v355, %v351
  %v357 = vmul.f32 %v335, %v356
  %358 = vst.msk [vmem:[%s6] sm:$0xff] %vm325, %v357
  // Predicated region
  $region26: #{action_conv_attention_encoder.5} parent=0 // pred_check
    _
  $region27: #{action_conv_attention_encoder.5} parent=0 // pred_check_branch
    %360 = sbr.rel (0) target = $region29
  $region28: #{action_conv_attention_encoder.5} parent=0 // pred_region
    _
  $region29: #{action_conv_attention_encoder.5} parent=0 // pred_fallthru
    _
  // Predicated region
  $region30: #{action_conv_attention_encoder.5} parent=0 // pred_check
    _
  $region31: #{action_conv_attention_encoder.5} parent=0 // pred_check_branch
    %362 = sbr.rel (0) target = $region33
  $region32: #{action_conv_attention_encoder.5} parent=0 // pred_region
    _
  $region33: #{action_conv_attention_encoder.5} parent=0 // pred_fallthru
    _

</llo_original>
